<compile_context>
chip_gen: v7x
topology: tpu7x:2x2x1
jax: 0.10.0
libtpu: 0.0.40
codegen_flags: <defaults>
</compile_context>

<pallas_src>
import jax
import jax.numpy as jnp
from jax import lax
from jax.experimental import pallas as pl
from jax.experimental.pallas import tpu as pltpu

HIDDEN = 64
OUT_FEATURES = 3


# ---------------------------------------------------------------------------
# Fused Pallas kernel: GRU layer 0 -> GRU layer 1 -> Linear(64, 3)
# ---------------------------------------------------------------------------
def gru_fused_kernel(x_ref,
                     wih0_ref, whhrz0_ref, whhn0_ref, bi0_ref, bhn0_ref,
                     wih1_ref, whhrz1_ref, whhn1_ref, bi1_ref, bhn1_ref,
                     wlin_ref, blin_ref,
                     out_ref):
    """Single-invocation fused forward pass.

    x_ref      : (T*B, D)   time-major rows (row = t*B + b), f32
    wih*_ref   : (in, 3H)   bf16, columns [r | z | n] (= PyTorch W_ih.T)
    whhrz*_ref : (H, 2H)    bf16, columns [r | z]     (= PyTorch W_hh[:2H].T)
    whhn*_ref  : (H, H)     bf16                      (= PyTorch W_hh[2H:].T)
    bi*_ref    : (1, 3H)    f32, [b_ir+b_hr | b_iz+b_hz | b_in]
    bhn*_ref   : (1, H)     f32, b_hn (scaled by r inside tanh)
    wlin_ref   : (H, 3) f32, blin_ref : (1, 3) f32
    out_ref    : (B, 3) f32
    """
    B = out_ref.shape[0]
    TB = x_ref.shape[0]
    T = TB // B
    H = whhn0_ref.shape[-1]
    H2 = 2 * H

    def run_layer(gi_rz, gi_n, whhrz_ref, whhn_ref, b_hn, collect):
        # Recurrent weights read once, outside the time loop.
        w_hrz = whhrz_ref[...]                      # (H, 2H) bf16
        w_hn = whhn_ref[...]                        # (H, H)  bf16
        h = jnp.zeros((B, H), jnp.float32)
        hs = []
        # Fully unrolled static time loop: only h @ W_hh + gate math stay on
        # the serial dependency chain. All elementwise math is f32 (v5e-safe).
        for t in range(T):
            lo = t * B
            h_b = h.astype(jnp.bfloat16)            # cast only the MXU operand
            gh_rz = jnp.dot(h_b, w_hrz, preferred_element_type=jnp.float32)
            gh_n = jnp.dot(h_b, w_hn, preferred_element_type=jnp.float32)
            rz = jax.nn.sigmoid(gi_rz[lo:lo + B, :] + gh_rz)   # one (B,128) EUP pass
            r = rz[:, :H]
            z = rz[:, H:]
            n = jnp.tanh(gi_n[lo:lo + B, :] + r * (gh_n + b_hn))
            h = (1.0 - z) * n + z * h
            if collect:
                hs.append(h)
        return h, hs

    # ---- layer 0: one fused input projection, hoisted out of the recurrence
    x_b = x_ref[...].astype(jnp.bfloat16)                           # (T*B, D)
    gi0 = jnp.dot(x_b, wih0_ref[...],
                  preferred_element_type=jnp.float32) + bi0_ref[...]  # (T*B, 3H)
    b_hn0 = jnp.broadcast_to(bhn0_ref[...], (B, H))                 # hoisted broadcast
    _, h1_list = run_layer(gi0[:, :H2], gi0[:, H2:],
                           whhrz0_ref, whhn0_ref, b_hn0, collect=True)

    # ---- layer 1: h1 sequence stays in registers (no VMEM round-trip).
    # Inter-layer dropout(0.1) is identity in eval mode.
    h1_all = jnp.concatenate(h1_list, axis=0).astype(jnp.bfloat16)  # (T*B, H)
    gi1 = jnp.dot(h1_all, wih1_ref[...],
                  preferred_element_type=jnp.float32) + bi1_ref[...]
    b_hn1 = jnp.broadcast_to(bhn1_ref[...], (B, H))
    h2, _ = run_layer(gi1[:, :H2], gi1[:, H2:],
                      whhrz1_ref, whhn1_ref, b_hn1, collect=False)

    # ---- linear head on last hidden state (pre-head dropout = identity).
    # Kept f32: tiny and off the critical path.
    out_ref[...] = (jnp.dot(h2, wlin_ref[...], preferred_element_type=jnp.float32)
                    + blin_ref[...])


# ---------------------------------------------------------------------------
# Wrapper
# ---------------------------------------------------------------------------
def _pack_gru_layer(w_ih, w_hh, b_ih, b_hh, hidden=HIDDEN):
    """PyTorch (3H,in)/(3H,H)/(3H,) params -> lane-aligned, gate-fused slabs."""
    H = hidden
    wih = w_ih.T.astype(jnp.bfloat16)                 # (in, 3H), cols [r|z|n]
    whh_rz = w_hh[:2 * H, :].T.astype(jnp.bfloat16)   # (H, 2H),  cols [r|z]
    whh_n = w_hh[2 * H:, :].T.astype(jnp.bfloat16)    # (H, H)
    b_i = jnp.concatenate([b_ih[:2 * H] + b_hh[:2 * H],   # folded r|z biases
                           b_ih[2 * H:]]).reshape(1, 3 * H).astype(jnp.float32)
    b_hn = b_hh[2 * H:].reshape(1, H).astype(jnp.float32)
    return wih, whh_rz, whh_n, b_i, b_hn


@jax.jit
def gru_model_forward(x_btd, params):
    """Pallas implementation of GRUmodel.forward (eval mode)."""
    B, T, D = x_btd.shape
    H = HIDDEN

    # Time-major 2-D view of x (row = t*B + b); a few KB, negligible XLA cost,
    # buys static contiguous row slices + one fused x @ W_ih matmul in-kernel.
    x_tm = jnp.transpose(x_btd, (1, 0, 2)).reshape(T * B, D).astype(jnp.float32)

    wih0, whhrz0, whhn0, bi0, bhn0 = _pack_gru_layer(
        params["w_ih_l0"], params["w_hh_l0"], params["b_ih_l0"], params["b_hh_l0"])
    wih1, whhrz1, whhn1, bi1, bhn1 = _pack_gru_layer(
        params["w_ih_l1"], params["w_hh_l1"], params["b_ih_l1"], params["b_hh_l1"])
    wlin = params["w_lin"].T.astype(jnp.float32)          # (H, 3)
    blin = params["b_lin"].reshape(1, -1).astype(jnp.float32)

    args = (x_tm, wih0, whhrz0, whhn0, bi0, bhn0,
            wih1, whhrz1, whhn1, bi1, bhn1, wlin, blin)

    flops = (2 * T * B * D * 3 * H            # layer-0 input projection
             + 2 * T * B * H * 3 * H          # layer-0 recurrence
             + 4 * T * B * H * 3 * H          # layer-1 projection + recurrence
             + 2 * B * H * OUT_FEATURES)      # linear head
    bytes_accessed = (sum(a.size * a.dtype.itemsize for a in args)
                      + B * OUT_FEATURES * 4)
    cost = pl.CostEstimate(flops=flops,
                           transcendentals=2 * 3 * T * B * H,
                           bytes_accessed=bytes_accessed)

    vmem = pl.BlockSpec(memory_space=pltpu.MemorySpace.VMEM)
    # NOTE(v7x): single-TC invocation; if B grows, add a batch grid axis with
    # dimension_semantics=("parallel",) to shard across both TensorCores.
    return pl.pallas_call(
        gru_fused_kernel,
        out_shape=jax.ShapeDtypeStruct((B, OUT_FEATURES), jnp.float32),
        in_specs=[vmem] * len(args),
        out_specs=vmem,
        cost_estimate=cost,
    )(*args)


def init_params(key, input_size, hidden=HIDDEN, out_features=OUT_FEATURES):
    """Deterministic init matching PyTorch parameter shapes (uniform +-1/sqrt(H))."""
    lim = 1.0 / jnp.sqrt(jnp.float32(hidden))
    keys = jax.random.split(key, 11)

    def u(k, shape):
        return jax.random.uniform(k, shape, jnp.float32, minval=-lim, maxval=lim)

    return {
        "w_ih_l0": u(keys[0], (3 * hidden, input_size)),
        "w_hh_l0": u(keys[1], (3 * hidden, hidden)),
        "b_ih_l0": u(keys[2], (3 * hidden,)),
        "b_hh_l0": u(keys[3], (3 * hidden,)),
        "w_ih_l1": u(keys[4], (3 * hidden, hidden)),
        "w_hh_l1": u(keys[5], (3 * hidden, hidden)),
        "b_ih_l1": u(keys[6], (3 * hidden,)),
        "b_hh_l1": u(keys[7], (3 * hidden,)),
        "w_lin": u(keys[8], (out_features, hidden)),
        "b_lin": u(keys[9], (out_features,)),
    }


# ---------------------------------------------------------------------------
# Pure-JAX f32 reference (PyTorch nn.GRU eval semantics) for correctness
# ---------------------------------------------------------------------------
def _gru_layer_ref(x_tbd, w_ih, w_hh, b_ih, b_hh):
    T, B, _ = x_tbd.shape
    H = w_hh.shape[1]

    def step(h, x_t):
        gi = x_t @ w_ih.T + b_ih
        gh = h @ w_hh.T + b_hh
        i_r, i_z, i_n = gi[:, :H], gi[:, H:2 * H], gi[:, 2 * H:]
        h_r, h_z, h_n = gh[:, :H], gh[:, H:2 * H], gh[:, 2 * H:]
        r = jax.nn.sigmoid(i_r + h_r)
        z = jax.nn.sigmoid(i_z + h_z)
        n = jnp.tanh(i_n + r * h_n)
        h_new = (1.0 - z) * n + z * h
        return h_new, h_new

    _, hs = lax.scan(step, jnp.zeros((B, H), jnp.float32), x_tbd)
    return hs


def ref_forward(x_btd, params):
    x = jnp.transpose(x_btd, (1, 0, 2))
    h1 = _gru_layer_ref(x, params["w_ih_l0"], params["w_hh_l0"],
                        params["b_ih_l0"], params["b_hh_l0"])
    h2 = _gru_layer_ref(h1, params["w_ih_l1"], params["w_hh_l1"],
                        params["b_ih_l1"], params["b_hh_l1"])
    return h2[-1] @ params["w_lin"].T + params["b_lin"]


if __name__ == "__main__":
    B, T, D = 8, 8, 16   # batch, seq_len, input_size (small, sublane-friendly)
    key = jax.random.PRNGKey(0)
    k_x, k_p = jax.random.split(key)

    x = jax.random.normal(k_x, (B, T, D), jnp.float32)
    params = init_params(k_p, input_size=D)

    out = gru_model_forward(x, params)
    out = jax.block_until_ready(out)
    assert out.shape == (B, OUT_FEATURES)

    # Kernel uses bf16 MXU operands (f32 accumulation / gate math), so compare
    # against the pure-f32 reference with a correspondingly loosened tolerance.
    ref = ref_forward(x, params)
    assert jnp.allclose(out, ref, atol=3e-2, rtol=3e-2), "mismatch vs reference"

    print("KERNEL_OK")
</pallas_src>

<mosaic_0001>
module attributes {stable_mosaic.version = 11 : i64} {
  func.func @gru_fused_kernel(%arg0: memref<64x16xf32, #tpu.memory_space<vmem>>, %arg1: memref<16x192xbf16, #tpu.memory_space<vmem>>, %arg2: memref<64x128xbf16, #tpu.memory_space<vmem>>, %arg3: memref<64x64xbf16, #tpu.memory_space<vmem>>, %arg4: memref<1x192xf32, #tpu.memory_space<vmem>>, %arg5: memref<1x64xf32, #tpu.memory_space<vmem>>, %arg6: memref<64x192xbf16, #tpu.memory_space<vmem>>, %arg7: memref<64x128xbf16, #tpu.memory_space<vmem>>, %arg8: memref<64x64xbf16, #tpu.memory_space<vmem>>, %arg9: memref<1x192xf32, #tpu.memory_space<vmem>>, %arg10: memref<1x64xf32, #tpu.memory_space<vmem>>, %arg11: memref<64x3xf32, #tpu.memory_space<vmem>>, %arg12: memref<1x3xf32, #tpu.memory_space<vmem>>, %arg13: memref<8x3xf32, #tpu.memory_space<vmem>>) attributes {dimension_semantics = [], scalar_prefetch = 0 : i64, scratch_operands = 0 : i64, tpu.core_type = #tpu.core_type<tc>} {
    %c0 = arith.constant 0 : index
    %c0_0 = arith.constant 0 : index
    %0 = vector.load %arg0[%c0, %c0_0] : memref<64x16xf32, #tpu.memory_space<vmem>>, vector<64x16xf32>
    %1 = arith.truncf %0 : vector<64x16xf32> to vector<64x16xbf16>
    %c0_1 = arith.constant 0 : index
    %c0_2 = arith.constant 0 : index
    %2 = vector.load %arg1[%c0_1, %c0_2] : memref<16x192xbf16, #tpu.memory_space<vmem>>, vector<16x192xbf16>
    %cst = arith.constant dense<0.000000e+00> : vector<64x192xf32>
    %3 = tpu.matmul %1, %2, %cst {dimension_numbers = #tpu.dot_dimension_numbers<[1], [0], [0], [1], [0, 0, 1, 1], [], []>} : vector<64x16xbf16>, vector<16x192xbf16>, vector<64x192xf32> -> vector<64x192xf32>
    %c0_3 = arith.constant 0 : index
    %c0_4 = arith.constant 0 : index
    %4 = vector.load %arg4[%c0_3, %c0_4] : memref<1x192xf32, #tpu.memory_space<vmem>>, vector<1x192xf32>
    %5 = vector.broadcast %4 : vector<1x192xf32> to vector<64x192xf32>
    %6 = arith.addf %3, %5 : vector<64x192xf32>
    %c0_5 = arith.constant 0 : index
    %c0_6 = arith.constant 0 : index
    %7 = vector.load %arg5[%c0_5, %c0_6] : memref<1x64xf32, #tpu.memory_space<vmem>>, vector<1x64xf32>
    %8 = vector.shape_cast %7 : vector<1x64xf32> to vector<1x64xf32>
    %9 = vector.broadcast %8 : vector<1x64xf32> to vector<8x64xf32>
    %10 = vector.extract_strided_slice %6 {offsets = [0, 0], sizes = [64, 128], strides = [1, 1]} : vector<64x192xf32> to vector<64x128xf32>
    %11 = vector.extract_strided_slice %6 {offsets = [0, 128], sizes = [64, 64], strides = [1, 1]} : vector<64x192xf32> to vector<64x64xf32>
    %c0_7 = arith.constant 0 : index
    %c0_8 = arith.constant 0 : index
    %12 = vector.load %arg2[%c0_7, %c0_8] : memref<64x128xbf16, #tpu.memory_space<vmem>>, vector<64x128xbf16>
    %c0_9 = arith.constant 0 : index
    %c0_10 = arith.constant 0 : index
    %13 = vector.load %arg3[%c0_9, %c0_10] : memref<64x64xbf16, #tpu.memory_space<vmem>>, vector<64x64xbf16>
    %cst_11 = arith.constant 0.000000e+00 : f32
    %14 = vector.broadcast %cst_11 : f32 to vector<8x64xf32>
    %15 = arith.truncf %14 : vector<8x64xf32> to vector<8x64xbf16>
    %cst_12 = arith.constant dense<0.000000e+00> : vector<8x128xf32>
    %16 = tpu.matmul %15, %12, %cst_12 {dimension_numbers = #tpu.dot_dimension_numbers<[1], [0], [0], [1], [0, 0, 1, 1], [], []>} : vector<8x64xbf16>, vector<64x128xbf16>, vector<8x128xf32> -> vector<8x128xf32>
    %cst_13 = arith.constant dense<0.000000e+00> : vector<8x64xf32>
    %17 = tpu.matmul %15, %13, %cst_13 {dimension_numbers = #tpu.dot_dimension_numbers<[1], [0], [0], [1], [0, 0, 1, 1], [], []>} : vector<8x64xbf16>, vector<64x64xbf16>, vector<8x64xf32> -> vector<8x64xf32>
    %18 = vector.extract_strided_slice %10 {offsets = [0, 0], sizes = [8, 128], strides = [1, 1]} : vector<64x128xf32> to vector<8x128xf32>
    %19 = arith.addf %18, %16 : vector<8x128xf32>
    %20 = arith.negf %19 : vector<8x128xf32>
    %21 = math.exp %20 : vector<8x128xf32>
    %cst_14 = arith.constant 1.000000e+00 : f32
    %22 = vector.broadcast %cst_14 : f32 to vector<8x128xf32>
    %23 = arith.addf %22, %21 : vector<8x128xf32>
    %24 = arith.divf %22, %23 : vector<8x128xf32>
    %25 = vector.extract_strided_slice %24 {offsets = [0, 0], sizes = [8, 64], strides = [1, 1]} : vector<8x128xf32> to vector<8x64xf32>
    %26 = vector.extract_strided_slice %24 {offsets = [0, 64], sizes = [8, 64], strides = [1, 1]} : vector<8x128xf32> to vector<8x64xf32>
    %27 = vector.extract_strided_slice %11 {offsets = [0, 0], sizes = [8, 64], strides = [1, 1]} : vector<64x64xf32> to vector<8x64xf32>
    %28 = arith.addf %17, %9 : vector<8x64xf32>
    %29 = arith.mulf %25, %28 : vector<8x64xf32>
    %30 = arith.addf %27, %29 : vector<8x64xf32>
    %31 = math.tanh %30 : vector<8x64xf32>
    %cst_15 = arith.constant 1.000000e+00 : f32
    %32 = vector.broadcast %cst_15 : f32 to vector<8x64xf32>
    %33 = arith.subf %32, %26 : vector<8x64xf32>
    %34 = arith.mulf %33, %31 : vector<8x64xf32>
    %35 = arith.mulf %26, %14 : vector<8x64xf32>
    %36 = arith.addf %34, %35 : vector<8x64xf32>
    %37 = arith.truncf %36 : vector<8x64xf32> to vector<8x64xbf16>
    %cst_16 = arith.constant dense<0.000000e+00> : vector<8x128xf32>
    %38 = tpu.matmul %37, %12, %cst_16 {dimension_numbers = #tpu.dot_dimension_numbers<[1], [0], [0], [1], [0, 0, 1, 1], [], []>} : vector<8x64xbf16>, vector<64x128xbf16>, vector<8x128xf32> -> vector<8x128xf32>
    %cst_17 = arith.constant dense<0.000000e+00> : vector<8x64xf32>
    %39 = tpu.matmul %37, %13, %cst_17 {dimension_numbers = #tpu.dot_dimension_numbers<[1], [0], [0], [1], [0, 0, 1, 1], [], []>} : vector<8x64xbf16>, vector<64x64xbf16>, vector<8x64xf32> -> vector<8x64xf32>
    %40 = vector.extract_strided_slice %10 {offsets = [8, 0], sizes = [8, 128], strides = [1, 1]} : vector<64x128xf32> to vector<8x128xf32>
    %41 = arith.addf %40, %38 : vector<8x128xf32>
    %42 = arith.negf %41 : vector<8x128xf32>
    %43 = math.exp %42 : vector<8x128xf32>
    %cst_18 = arith.constant 1.000000e+00 : f32
    %44 = vector.broadcast %cst_18 : f32 to vector<8x128xf32>
    %45 = arith.addf %44, %43 : vector<8x128xf32>
    %46 = arith.divf %44, %45 : vector<8x128xf32>
    %47 = vector.extract_strided_slice %46 {offsets = [0, 0], sizes = [8, 64], strides = [1, 1]} : vector<8x128xf32> to vector<8x64xf32>
    %48 = vector.extract_strided_slice %46 {offsets = [0, 64], sizes = [8, 64], strides = [1, 1]} : vector<8x128xf32> to vector<8x64xf32>
    %49 = vector.extract_strided_slice %11 {offsets = [8, 0], sizes = [8, 64], strides = [1, 1]} : vector<64x64xf32> to vector<8x64xf32>
    %50 = arith.addf %39, %9 : vector<8x64xf32>
    %51 = arith.mulf %47, %50 : vector<8x64xf32>
    %52 = arith.addf %49, %51 : vector<8x64xf32>
    %53 = math.tanh %52 : vector<8x64xf32>
    %cst_19 = arith.constant 1.000000e+00 : f32
    %54 = vector.broadcast %cst_19 : f32 to vector<8x64xf32>
    %55 = arith.subf %54, %48 : vector<8x64xf32>
    %56 = arith.mulf %55, %53 : vector<8x64xf32>
    %57 = arith.mulf %48, %36 : vector<8x64xf32>
    %58 = arith.addf %56, %57 : vector<8x64xf32>
    %59 = arith.truncf %58 : vector<8x64xf32> to vector<8x64xbf16>
    %cst_20 = arith.constant dense<0.000000e+00> : vector<8x128xf32>
    %60 = tpu.matmul %59, %12, %cst_20 {dimension_numbers = #tpu.dot_dimension_numbers<[1], [0], [0], [1], [0, 0, 1, 1], [], []>} : vector<8x64xbf16>, vector<64x128xbf16>, vector<8x128xf32> -> vector<8x128xf32>
    %cst_21 = arith.constant dense<0.000000e+00> : vector<8x64xf32>
    %61 = tpu.matmul %59, %13, %cst_21 {dimension_numbers = #tpu.dot_dimension_numbers<[1], [0], [0], [1], [0, 0, 1, 1], [], []>} : vector<8x64xbf16>, vector<64x64xbf16>, vector<8x64xf32> -> vector<8x64xf32>
    %62 = vector.extract_strided_slice %10 {offsets = [16, 0], sizes = [8, 128], strides = [1, 1]} : vector<64x128xf32> to vector<8x128xf32>
    %63 = arith.addf %62, %60 : vector<8x128xf32>
    %64 = arith.negf %63 : vector<8x128xf32>
    %65 = math.exp %64 : vector<8x128xf32>
    %cst_22 = arith.constant 1.000000e+00 : f32
    %66 = vector.broadcast %cst_22 : f32 to vector<8x128xf32>
    %67 = arith.addf %66, %65 : vector<8x128xf32>
    %68 = arith.divf %66, %67 : vector<8x128xf32>
    %69 = vector.extract_strided_slice %68 {offsets = [0, 0], sizes = [8, 64], strides = [1, 1]} : vector<8x128xf32> to vector<8x64xf32>
    %70 = vector.extract_strided_slice %68 {offsets = [0, 64], sizes = [8, 64], strides = [1, 1]} : vector<8x128xf32> to vector<8x64xf32>
    %71 = vector.extract_strided_slice %11 {offsets = [16, 0], sizes = [8, 64], strides = [1, 1]} : vector<64x64xf32> to vector<8x64xf32>
    %72 = arith.addf %61, %9 : vector<8x64xf32>
    %73 = arith.mulf %69, %72 : vector<8x64xf32>
    %74 = arith.addf %71, %73 : vector<8x64xf32>
    %75 = math.tanh %74 : vector<8x64xf32>
    %cst_23 = arith.constant 1.000000e+00 : f32
    %76 = vector.broadcast %cst_23 : f32 to vector<8x64xf32>
    %77 = arith.subf %76, %70 : vector<8x64xf32>
    %78 = arith.mulf %77, %75 : vector<8x64xf32>
    %79 = arith.mulf %70, %58 : vector<8x64xf32>
    %80 = arith.addf %78, %79 : vector<8x64xf32>
    %81 = arith.truncf %80 : vector<8x64xf32> to vector<8x64xbf16>
    %cst_24 = arith.constant dense<0.000000e+00> : vector<8x128xf32>
    %82 = tpu.matmul %81, %12, %cst_24 {dimension_numbers = #tpu.dot_dimension_numbers<[1], [0], [0], [1], [0, 0, 1, 1], [], []>} : vector<8x64xbf16>, vector<64x128xbf16>, vector<8x128xf32> -> vector<8x128xf32>
    %cst_25 = arith.constant dense<0.000000e+00> : vector<8x64xf32>
    %83 = tpu.matmul %81, %13, %cst_25 {dimension_numbers = #tpu.dot_dimension_numbers<[1], [0], [0], [1], [0, 0, 1, 1], [], []>} : vector<8x64xbf16>, vector<64x64xbf16>, vector<8x64xf32> -> vector<8x64xf32>
    %84 = vector.extract_strided_slice %10 {offsets = [24, 0], sizes = [8, 128], strides = [1, 1]} : vector<64x128xf32> to vector<8x128xf32>
    %85 = arith.addf %84, %82 : vector<8x128xf32>
    %86 = arith.negf %85 : vector<8x128xf32>
    %87 = math.exp %86 : vector<8x128xf32>
    %cst_26 = arith.constant 1.000000e+00 : f32
    %88 = vector.broadcast %cst_26 : f32 to vector<8x128xf32>
    %89 = arith.addf %88, %87 : vector<8x128xf32>
    %90 = arith.divf %88, %89 : vector<8x128xf32>
    %91 = vector.extract_strided_slice %90 {offsets = [0, 0], sizes = [8, 64], strides = [1, 1]} : vector<8x128xf32> to vector<8x64xf32>
    %92 = vector.extract_strided_slice %90 {offsets = [0, 64], sizes = [8, 64], strides = [1, 1]} : vector<8x128xf32> to vector<8x64xf32>
    %93 = vector.extract_strided_slice %11 {offsets = [24, 0], sizes = [8, 64], strides = [1, 1]} : vector<64x64xf32> to vector<8x64xf32>
    %94 = arith.addf %83, %9 : vector<8x64xf32>
    %95 = arith.mulf %91, %94 : vector<8x64xf32>
    %96 = arith.addf %93, %95 : vector<8x64xf32>
    %97 = math.tanh %96 : vector<8x64xf32>
    %cst_27 = arith.constant 1.000000e+00 : f32
    %98 = vector.broadcast %cst_27 : f32 to vector<8x64xf32>
    %99 = arith.subf %98, %92 : vector<8x64xf32>
    %100 = arith.mulf %99, %97 : vector<8x64xf32>
    %101 = arith.mulf %92, %80 : vector<8x64xf32>
    %102 = arith.addf %100, %101 : vector<8x64xf32>
    %103 = arith.truncf %102 : vector<8x64xf32> to vector<8x64xbf16>
    %cst_28 = arith.constant dense<0.000000e+00> : vector<8x128xf32>
    %104 = tpu.matmul %103, %12, %cst_28 {dimension_numbers = #tpu.dot_dimension_numbers<[1], [0], [0], [1], [0, 0, 1, 1], [], []>} : vector<8x64xbf16>, vector<64x128xbf16>, vector<8x128xf32> -> vector<8x128xf32>
    %cst_29 = arith.constant dense<0.000000e+00> : vector<8x64xf32>
    %105 = tpu.matmul %103, %13, %cst_29 {dimension_numbers = #tpu.dot_dimension_numbers<[1], [0], [0], [1], [0, 0, 1, 1], [], []>} : vector<8x64xbf16>, vector<64x64xbf16>, vector<8x64xf32> -> vector<8x64xf32>
    %106 = vector.extract_strided_slice %10 {offsets = [32, 0], sizes = [8, 128], strides = [1, 1]} : vector<64x128xf32> to vector<8x128xf32>
    %107 = arith.addf %106, %104 : vector<8x128xf32>
    %108 = arith.negf %107 : vector<8x128xf32>
    %109 = math.exp %108 : vector<8x128xf32>
    %cst_30 = arith.constant 1.000000e+00 : f32
    %110 = vector.broadcast %cst_30 : f32 to vector<8x128xf32>
    %111 = arith.addf %110, %109 : vector<8x128xf32>
    %112 = arith.divf %110, %111 : vector<8x128xf32>
    %113 = vector.extract_strided_slice %112 {offsets = [0, 0], sizes = [8, 64], strides = [1, 1]} : vector<8x128xf32> to vector<8x64xf32>
    %114 = vector.extract_strided_slice %112 {offsets = [0, 64], sizes = [8, 64], strides = [1, 1]} : vector<8x128xf32> to vector<8x64xf32>
    %115 = vector.extract_strided_slice %11 {offsets = [32, 0], sizes = [8, 64], strides = [1, 1]} : vector<64x64xf32> to vector<8x64xf32>
    %116 = arith.addf %105, %9 : vector<8x64xf32>
    %117 = arith.mulf %113, %116 : vector<8x64xf32>
    %118 = arith.addf %115, %117 : vector<8x64xf32>
    %119 = math.tanh %118 : vector<8x64xf32>
    %cst_31 = arith.constant 1.000000e+00 : f32
    %120 = vector.broadcast %cst_31 : f32 to vector<8x64xf32>
    %121 = arith.subf %120, %114 : vector<8x64xf32>
    %122 = arith.mulf %121, %119 : vector<8x64xf32>
    %123 = arith.mulf %114, %102 : vector<8x64xf32>
    %124 = arith.addf %122, %123 : vector<8x64xf32>
    %125 = arith.truncf %124 : vector<8x64xf32> to vector<8x64xbf16>
    %cst_32 = arith.constant dense<0.000000e+00> : vector<8x128xf32>
    %126 = tpu.matmul %125, %12, %cst_32 {dimension_numbers = #tpu.dot_dimension_numbers<[1], [0], [0], [1], [0, 0, 1, 1], [], []>} : vector<8x64xbf16>, vector<64x128xbf16>, vector<8x128xf32> -> vector<8x128xf32>
    %cst_33 = arith.constant dense<0.000000e+00> : vector<8x64xf32>
    %127 = tpu.matmul %125, %13, %cst_33 {dimension_numbers = #tpu.dot_dimension_numbers<[1], [0], [0], [1], [0, 0, 1, 1], [], []>} : vector<8x64xbf16>, vector<64x64xbf16>, vector<8x64xf32> -> vector<8x64xf32>
    %128 = vector.extract_strided_slice %10 {offsets = [40, 0], sizes = [8, 128], strides = [1, 1]} : vector<64x128xf32> to vector<8x128xf32>
    %129 = arith.addf %128, %126 : vector<8x128xf32>
    %130 = arith.negf %129 : vector<8x128xf32>
    %131 = math.exp %130 : vector<8x128xf32>
    %cst_34 = arith.constant 1.000000e+00 : f32
    %132 = vector.broadcast %cst_34 : f32 to vector<8x128xf32>
    %133 = arith.addf %132, %131 : vector<8x128xf32>
    %134 = arith.divf %132, %133 : vector<8x128xf32>
    %135 = vector.extract_strided_slice %134 {offsets = [0, 0], sizes = [8, 64], strides = [1, 1]} : vector<8x128xf32> to vector<8x64xf32>
    %136 = vector.extract_strided_slice %134 {offsets = [0, 64], sizes = [8, 64], strides = [1, 1]} : vector<8x128xf32> to vector<8x64xf32>
    %137 = vector.extract_strided_slice %11 {offsets = [40, 0], sizes = [8, 64], strides = [1, 1]} : vector<64x64xf32> to vector<8x64xf32>
    %138 = arith.addf %127, %9 : vector<8x64xf32>
    %139 = arith.mulf %135, %138 : vector<8x64xf32>
    %140 = arith.addf %137, %139 : vector<8x64xf32>
    %141 = math.tanh %140 : vector<8x64xf32>
    %cst_35 = arith.constant 1.000000e+00 : f32
    %142 = vector.broadcast %cst_35 : f32 to vector<8x64xf32>
    %143 = arith.subf %142, %136 : vector<8x64xf32>
    %144 = arith.mulf %143, %141 : vector<8x64xf32>
    %145 = arith.mulf %136, %124 : vector<8x64xf32>
    %146 = arith.addf %144, %145 : vector<8x64xf32>
    %147 = arith.truncf %146 : vector<8x64xf32> to vector<8x64xbf16>
    %cst_36 = arith.constant dense<0.000000e+00> : vector<8x128xf32>
    %148 = tpu.matmul %147, %12, %cst_36 {dimension_numbers = #tpu.dot_dimension_numbers<[1], [0], [0], [1], [0, 0, 1, 1], [], []>} : vector<8x64xbf16>, vector<64x128xbf16>, vector<8x128xf32> -> vector<8x128xf32>
    %cst_37 = arith.constant dense<0.000000e+00> : vector<8x64xf32>
    %149 = tpu.matmul %147, %13, %cst_37 {dimension_numbers = #tpu.dot_dimension_numbers<[1], [0], [0], [1], [0, 0, 1, 1], [], []>} : vector<8x64xbf16>, vector<64x64xbf16>, vector<8x64xf32> -> vector<8x64xf32>
    %150 = vector.extract_strided_slice %10 {offsets = [48, 0], sizes = [8, 128], strides = [1, 1]} : vector<64x128xf32> to vector<8x128xf32>
    %151 = arith.addf %150, %148 : vector<8x128xf32>
    %152 = arith.negf %151 : vector<8x128xf32>
    %153 = math.exp %152 : vector<8x128xf32>
    %cst_38 = arith.constant 1.000000e+00 : f32
    %154 = vector.broadcast %cst_38 : f32 to vector<8x128xf32>
    %155 = arith.addf %154, %153 : vector<8x128xf32>
    %156 = arith.divf %154, %155 : vector<8x128xf32>
    %157 = vector.extract_strided_slice %156 {offsets = [0, 0], sizes = [8, 64], strides = [1, 1]} : vector<8x128xf32> to vector<8x64xf32>
    %158 = vector.extract_strided_slice %156 {offsets = [0, 64], sizes = [8, 64], strides = [1, 1]} : vector<8x128xf32> to vector<8x64xf32>
    %159 = vector.extract_strided_slice %11 {offsets = [48, 0], sizes = [8, 64], strides = [1, 1]} : vector<64x64xf32> to vector<8x64xf32>
    %160 = arith.addf %149, %9 : vector<8x64xf32>
    %161 = arith.mulf %157, %160 : vector<8x64xf32>
    %162 = arith.addf %159, %161 : vector<8x64xf32>
    %163 = math.tanh %162 : vector<8x64xf32>
    %cst_39 = arith.constant 1.000000e+00 : f32
    %164 = vector.broadcast %cst_39 : f32 to vector<8x64xf32>
    %165 = arith.subf %164, %158 : vector<8x64xf32>
    %166 = arith.mulf %165, %163 : vector<8x64xf32>
    %167 = arith.mulf %158, %146 : vector<8x64xf32>
    %168 = arith.addf %166, %167 : vector<8x64xf32>
    %169 = arith.truncf %168 : vector<8x64xf32> to vector<8x64xbf16>
    %cst_40 = arith.constant dense<0.000000e+00> : vector<8x128xf32>
    %170 = tpu.matmul %169, %12, %cst_40 {dimension_numbers = #tpu.dot_dimension_numbers<[1], [0], [0], [1], [0, 0, 1, 1], [], []>} : vector<8x64xbf16>, vector<64x128xbf16>, vector<8x128xf32> -> vector<8x128xf32>
    %cst_41 = arith.constant dense<0.000000e+00> : vector<8x64xf32>
    %171 = tpu.matmul %169, %13, %cst_41 {dimension_numbers = #tpu.dot_dimension_numbers<[1], [0], [0], [1], [0, 0, 1, 1], [], []>} : vector<8x64xbf16>, vector<64x64xbf16>, vector<8x64xf32> -> vector<8x64xf32>
    %172 = vector.extract_strided_slice %10 {offsets = [56, 0], sizes = [8, 128], strides = [1, 1]} : vector<64x128xf32> to vector<8x128xf32>
    %173 = arith.addf %172, %170 : vector<8x128xf32>
    %174 = arith.negf %173 : vector<8x128xf32>
    %175 = math.exp %174 : vector<8x128xf32>
    %cst_42 = arith.constant 1.000000e+00 : f32
    %176 = vector.broadcast %cst_42 : f32 to vector<8x128xf32>
    %177 = arith.addf %176, %175 : vector<8x128xf32>
    %178 = arith.divf %176, %177 : vector<8x128xf32>
    %179 = vector.extract_strided_slice %178 {offsets = [0, 0], sizes = [8, 64], strides = [1, 1]} : vector<8x128xf32> to vector<8x64xf32>
    %180 = vector.extract_strided_slice %178 {offsets = [0, 64], sizes = [8, 64], strides = [1, 1]} : vector<8x128xf32> to vector<8x64xf32>
    %181 = vector.extract_strided_slice %11 {offsets = [56, 0], sizes = [8, 64], strides = [1, 1]} : vector<64x64xf32> to vector<8x64xf32>
    %182 = arith.addf %171, %9 : vector<8x64xf32>
    %183 = arith.mulf %179, %182 : vector<8x64xf32>
    %184 = arith.addf %181, %183 : vector<8x64xf32>
    %185 = math.tanh %184 : vector<8x64xf32>
    %cst_43 = arith.constant 1.000000e+00 : f32
    %186 = vector.broadcast %cst_43 : f32 to vector<8x64xf32>
    %187 = arith.subf %186, %180 : vector<8x64xf32>
    %188 = arith.mulf %187, %185 : vector<8x64xf32>
    %189 = arith.mulf %180, %168 : vector<8x64xf32>
    %190 = arith.addf %188, %189 : vector<8x64xf32>
    %191 = tpu.concatenate %36, %58, %80, %102, %124, %146, %168, %190 in 0 : vector<8x64xf32>, vector<8x64xf32>, vector<8x64xf32>, vector<8x64xf32>, vector<8x64xf32>, vector<8x64xf32>, vector<8x64xf32>, vector<8x64xf32> -> vector<64x64xf32>
    %192 = arith.truncf %191 : vector<64x64xf32> to vector<64x64xbf16>
    %c0_44 = arith.constant 0 : index
    %c0_45 = arith.constant 0 : index
    %193 = vector.load %arg6[%c0_44, %c0_45] : memref<64x192xbf16, #tpu.memory_space<vmem>>, vector<64x192xbf16>
    %cst_46 = arith.constant dense<0.000000e+00> : vector<64x192xf32>
    %194 = tpu.matmul %192, %193, %cst_46 {dimension_numbers = #tpu.dot_dimension_numbers<[1], [0], [0], [1], [0, 0, 1, 1], [], []>} : vector<64x64xbf16>, vector<64x192xbf16>, vector<64x192xf32> -> vector<64x192xf32>
    %c0_47 = arith.constant 0 : index
    %c0_48 = arith.constant 0 : index
    %195 = vector.load %arg9[%c0_47, %c0_48] : memref<1x192xf32, #tpu.memory_space<vmem>>, vector<1x192xf32>
    %196 = vector.broadcast %195 : vector<1x192xf32> to vector<64x192xf32>
    %197 = arith.addf %194, %196 : vector<64x192xf32>
    %c0_49 = arith.constant 0 : index
    %c0_50 = arith.constant 0 : index
    %198 = vector.load %arg10[%c0_49, %c0_50] : memref<1x64xf32, #tpu.memory_space<vmem>>, vector<1x64xf32>
    %199 = vector.shape_cast %198 : vector<1x64xf32> to vector<1x64xf32>
    %200 = vector.broadcast %199 : vector<1x64xf32> to vector<8x64xf32>
    %201 = vector.extract_strided_slice %197 {offsets = [0, 0], sizes = [64, 128], strides = [1, 1]} : vector<64x192xf32> to vector<64x128xf32>
    %202 = vector.extract_strided_slice %197 {offsets = [0, 128], sizes = [64, 64], strides = [1, 1]} : vector<64x192xf32> to vector<64x64xf32>
    %c0_51 = arith.constant 0 : index
    %c0_52 = arith.constant 0 : index
    %203 = vector.load %arg7[%c0_51, %c0_52] : memref<64x128xbf16, #tpu.memory_space<vmem>>, vector<64x128xbf16>
    %c0_53 = arith.constant 0 : index
    %c0_54 = arith.constant 0 : index
    %204 = vector.load %arg8[%c0_53, %c0_54] : memref<64x64xbf16, #tpu.memory_space<vmem>>, vector<64x64xbf16>
    %cst_55 = arith.constant 0.000000e+00 : f32
    %205 = vector.broadcast %cst_55 : f32 to vector<8x64xf32>
    %206 = arith.truncf %205 : vector<8x64xf32> to vector<8x64xbf16>
    %cst_56 = arith.constant dense<0.000000e+00> : vector<8x128xf32>
    %207 = tpu.matmul %206, %203, %cst_56 {dimension_numbers = #tpu.dot_dimension_numbers<[1], [0], [0], [1], [0, 0, 1, 1], [], []>} : vector<8x64xbf16>, vector<64x128xbf16>, vector<8x128xf32> -> vector<8x128xf32>
    %cst_57 = arith.constant dense<0.000000e+00> : vector<8x64xf32>
    %208 = tpu.matmul %206, %204, %cst_57 {dimension_numbers = #tpu.dot_dimension_numbers<[1], [0], [0], [1], [0, 0, 1, 1], [], []>} : vector<8x64xbf16>, vector<64x64xbf16>, vector<8x64xf32> -> vector<8x64xf32>
    %209 = vector.extract_strided_slice %201 {offsets = [0, 0], sizes = [8, 128], strides = [1, 1]} : vector<64x128xf32> to vector<8x128xf32>
    %210 = arith.addf %209, %207 : vector<8x128xf32>
    %211 = arith.negf %210 : vector<8x128xf32>
    %212 = math.exp %211 : vector<8x128xf32>
    %cst_58 = arith.constant 1.000000e+00 : f32
    %213 = vector.broadcast %cst_58 : f32 to vector<8x128xf32>
    %214 = arith.addf %213, %212 : vector<8x128xf32>
    %215 = arith.divf %213, %214 : vector<8x128xf32>
    %216 = vector.extract_strided_slice %215 {offsets = [0, 0], sizes = [8, 64], strides = [1, 1]} : vector<8x128xf32> to vector<8x64xf32>
    %217 = vector.extract_strided_slice %215 {offsets = [0, 64], sizes = [8, 64], strides = [1, 1]} : vector<8x128xf32> to vector<8x64xf32>
    %218 = vector.extract_strided_slice %202 {offsets = [0, 0], sizes = [8, 64], strides = [1, 1]} : vector<64x64xf32> to vector<8x64xf32>
    %219 = arith.addf %208, %200 : vector<8x64xf32>
    %220 = arith.mulf %216, %219 : vector<8x64xf32>
    %221 = arith.addf %218, %220 : vector<8x64xf32>
    %222 = math.tanh %221 : vector<8x64xf32>
    %cst_59 = arith.constant 1.000000e+00 : f32
    %223 = vector.broadcast %cst_59 : f32 to vector<8x64xf32>
    %224 = arith.subf %223, %217 : vector<8x64xf32>
    %225 = arith.mulf %224, %222 : vector<8x64xf32>
    %226 = arith.mulf %217, %205 : vector<8x64xf32>
    %227 = arith.addf %225, %226 : vector<8x64xf32>
    %228 = arith.truncf %227 : vector<8x64xf32> to vector<8x64xbf16>
    %cst_60 = arith.constant dense<0.000000e+00> : vector<8x128xf32>
    %229 = tpu.matmul %228, %203, %cst_60 {dimension_numbers = #tpu.dot_dimension_numbers<[1], [0], [0], [1], [0, 0, 1, 1], [], []>} : vector<8x64xbf16>, vector<64x128xbf16>, vector<8x128xf32> -> vector<8x128xf32>
    %cst_61 = arith.constant dense<0.000000e+00> : vector<8x64xf32>
    %230 = tpu.matmul %228, %204, %cst_61 {dimension_numbers = #tpu.dot_dimension_numbers<[1], [0], [0], [1], [0, 0, 1, 1], [], []>} : vector<8x64xbf16>, vector<64x64xbf16>, vector<8x64xf32> -> vector<8x64xf32>
    %231 = vector.extract_strided_slice %201 {offsets = [8, 0], sizes = [8, 128], strides = [1, 1]} : vector<64x128xf32> to vector<8x128xf32>
    %232 = arith.addf %231, %229 : vector<8x128xf32>
    %233 = arith.negf %232 : vector<8x128xf32>
    %234 = math.exp %233 : vector<8x128xf32>
    %cst_62 = arith.constant 1.000000e+00 : f32
    %235 = vector.broadcast %cst_62 : f32 to vector<8x128xf32>
    %236 = arith.addf %235, %234 : vector<8x128xf32>
    %237 = arith.divf %235, %236 : vector<8x128xf32>
    %238 = vector.extract_strided_slice %237 {offsets = [0, 0], sizes = [8, 64], strides = [1, 1]} : vector<8x128xf32> to vector<8x64xf32>
    %239 = vector.extract_strided_slice %237 {offsets = [0, 64], sizes = [8, 64], strides = [1, 1]} : vector<8x128xf32> to vector<8x64xf32>
    %240 = vector.extract_strided_slice %202 {offsets = [8, 0], sizes = [8, 64], strides = [1, 1]} : vector<64x64xf32> to vector<8x64xf32>
    %241 = arith.addf %230, %200 : vector<8x64xf32>
    %242 = arith.mulf %238, %241 : vector<8x64xf32>
    %243 = arith.addf %240, %242 : vector<8x64xf32>
    %244 = math.tanh %243 : vector<8x64xf32>
    %cst_63 = arith.constant 1.000000e+00 : f32
    %245 = vector.broadcast %cst_63 : f32 to vector<8x64xf32>
    %246 = arith.subf %245, %239 : vector<8x64xf32>
    %247 = arith.mulf %246, %244 : vector<8x64xf32>
    %248 = arith.mulf %239, %227 : vector<8x64xf32>
    %249 = arith.addf %247, %248 : vector<8x64xf32>
    %250 = arith.truncf %249 : vector<8x64xf32> to vector<8x64xbf16>
    %cst_64 = arith.constant dense<0.000000e+00> : vector<8x128xf32>
    %251 = tpu.matmul %250, %203, %cst_64 {dimension_numbers = #tpu.dot_dimension_numbers<[1], [0], [0], [1], [0, 0, 1, 1], [], []>} : vector<8x64xbf16>, vector<64x128xbf16>, vector<8x128xf32> -> vector<8x128xf32>
    %cst_65 = arith.constant dense<0.000000e+00> : vector<8x64xf32>
    %252 = tpu.matmul %250, %204, %cst_65 {dimension_numbers = #tpu.dot_dimension_numbers<[1], [0], [0], [1], [0, 0, 1, 1], [], []>} : vector<8x64xbf16>, vector<64x64xbf16>, vector<8x64xf32> -> vector<8x64xf32>
    %253 = vector.extract_strided_slice %201 {offsets = [16, 0], sizes = [8, 128], strides = [1, 1]} : vector<64x128xf32> to vector<8x128xf32>
    %254 = arith.addf %253, %251 : vector<8x128xf32>
    %255 = arith.negf %254 : vector<8x128xf32>
    %256 = math.exp %255 : vector<8x128xf32>
    %cst_66 = arith.constant 1.000000e+00 : f32
    %257 = vector.broadcast %cst_66 : f32 to vector<8x128xf32>
    %258 = arith.addf %257, %256 : vector<8x128xf32>
    %259 = arith.divf %257, %258 : vector<8x128xf32>
    %260 = vector.extract_strided_slice %259 {offsets = [0, 0], sizes = [8, 64], strides = [1, 1]} : vector<8x128xf32> to vector<8x64xf32>
    %261 = vector.extract_strided_slice %259 {offsets = [0, 64], sizes = [8, 64], strides = [1, 1]} : vector<8x128xf32> to vector<8x64xf32>
    %262 = vector.extract_strided_slice %202 {offsets = [16, 0], sizes = [8, 64], strides = [1, 1]} : vector<64x64xf32> to vector<8x64xf32>
    %263 = arith.addf %252, %200 : vector<8x64xf32>
    %264 = arith.mulf %260, %263 : vector<8x64xf32>
    %265 = arith.addf %262, %264 : vector<8x64xf32>
    %266 = math.tanh %265 : vector<8x64xf32>
    %cst_67 = arith.constant 1.000000e+00 : f32
    %267 = vector.broadcast %cst_67 : f32 to vector<8x64xf32>
    %268 = arith.subf %267, %261 : vector<8x64xf32>
    %269 = arith.mulf %268, %266 : vector<8x64xf32>
    %270 = arith.mulf %261, %249 : vector<8x64xf32>
    %271 = arith.addf %269, %270 : vector<8x64xf32>
    %272 = arith.truncf %271 : vector<8x64xf32> to vector<8x64xbf16>
    %cst_68 = arith.constant dense<0.000000e+00> : vector<8x128xf32>
    %273 = tpu.matmul %272, %203, %cst_68 {dimension_numbers = #tpu.dot_dimension_numbers<[1], [0], [0], [1], [0, 0, 1, 1], [], []>} : vector<8x64xbf16>, vector<64x128xbf16>, vector<8x128xf32> -> vector<8x128xf32>
    %cst_69 = arith.constant dense<0.000000e+00> : vector<8x64xf32>
    %274 = tpu.matmul %272, %204, %cst_69 {dimension_numbers = #tpu.dot_dimension_numbers<[1], [0], [0], [1], [0, 0, 1, 1], [], []>} : vector<8x64xbf16>, vector<64x64xbf16>, vector<8x64xf32> -> vector<8x64xf32>
    %275 = vector.extract_strided_slice %201 {offsets = [24, 0], sizes = [8, 128], strides = [1, 1]} : vector<64x128xf32> to vector<8x128xf32>
    %276 = arith.addf %275, %273 : vector<8x128xf32>
    %277 = arith.negf %276 : vector<8x128xf32>
    %278 = math.exp %277 : vector<8x128xf32>
    %cst_70 = arith.constant 1.000000e+00 : f32
    %279 = vector.broadcast %cst_70 : f32 to vector<8x128xf32>
    %280 = arith.addf %279, %278 : vector<8x128xf32>
    %281 = arith.divf %279, %280 : vector<8x128xf32>
    %282 = vector.extract_strided_slice %281 {offsets = [0, 0], sizes = [8, 64], strides = [1, 1]} : vector<8x128xf32> to vector<8x64xf32>
    %283 = vector.extract_strided_slice %281 {offsets = [0, 64], sizes = [8, 64], strides = [1, 1]} : vector<8x128xf32> to vector<8x64xf32>
    %284 = vector.extract_strided_slice %202 {offsets = [24, 0], sizes = [8, 64], strides = [1, 1]} : vector<64x64xf32> to vector<8x64xf32>
    %285 = arith.addf %274, %200 : vector<8x64xf32>
    %286 = arith.mulf %282, %285 : vector<8x64xf32>
    %287 = arith.addf %284, %286 : vector<8x64xf32>
    %288 = math.tanh %287 : vector<8x64xf32>
    %cst_71 = arith.constant 1.000000e+00 : f32
    %289 = vector.broadcast %cst_71 : f32 to vector<8x64xf32>
    %290 = arith.subf %289, %283 : vector<8x64xf32>
    %291 = arith.mulf %290, %288 : vector<8x64xf32>
    %292 = arith.mulf %283, %271 : vector<8x64xf32>
    %293 = arith.addf %291, %292 : vector<8x64xf32>
    %294 = arith.truncf %293 : vector<8x64xf32> to vector<8x64xbf16>
    %cst_72 = arith.constant dense<0.000000e+00> : vector<8x128xf32>
    %295 = tpu.matmul %294, %203, %cst_72 {dimension_numbers = #tpu.dot_dimension_numbers<[1], [0], [0], [1], [0, 0, 1, 1], [], []>} : vector<8x64xbf16>, vector<64x128xbf16>, vector<8x128xf32> -> vector<8x128xf32>
    %cst_73 = arith.constant dense<0.000000e+00> : vector<8x64xf32>
    %296 = tpu.matmul %294, %204, %cst_73 {dimension_numbers = #tpu.dot_dimension_numbers<[1], [0], [0], [1], [0, 0, 1, 1], [], []>} : vector<8x64xbf16>, vector<64x64xbf16>, vector<8x64xf32> -> vector<8x64xf32>
    %297 = vector.extract_strided_slice %201 {offsets = [32, 0], sizes = [8, 128], strides = [1, 1]} : vector<64x128xf32> to vector<8x128xf32>
    %298 = arith.addf %297, %295 : vector<8x128xf32>
    %299 = arith.negf %298 : vector<8x128xf32>
    %300 = math.exp %299 : vector<8x128xf32>
    %cst_74 = arith.constant 1.000000e+00 : f32
    %301 = vector.broadcast %cst_74 : f32 to vector<8x128xf32>
    %302 = arith.addf %301, %300 : vector<8x128xf32>
    %303 = arith.divf %301, %302 : vector<8x128xf32>
    %304 = vector.extract_strided_slice %303 {offsets = [0, 0], sizes = [8, 64], strides = [1, 1]} : vector<8x128xf32> to vector<8x64xf32>
    %305 = vector.extract_strided_slice %303 {offsets = [0, 64], sizes = [8, 64], strides = [1, 1]} : vector<8x128xf32> to vector<8x64xf32>
    %306 = vector.extract_strided_slice %202 {offsets = [32, 0], sizes = [8, 64], strides = [1, 1]} : vector<64x64xf32> to vector<8x64xf32>
    %307 = arith.addf %296, %200 : vector<8x64xf32>
    %308 = arith.mulf %304, %307 : vector<8x64xf32>
    %309 = arith.addf %306, %308 : vector<8x64xf32>
    %310 = math.tanh %309 : vector<8x64xf32>
    %cst_75 = arith.constant 1.000000e+00 : f32
    %311 = vector.broadcast %cst_75 : f32 to vector<8x64xf32>
    %312 = arith.subf %311, %305 : vector<8x64xf32>
    %313 = arith.mulf %312, %310 : vector<8x64xf32>
    %314 = arith.mulf %305, %293 : vector<8x64xf32>
    %315 = arith.addf %313, %314 : vector<8x64xf32>
    %316 = arith.truncf %315 : vector<8x64xf32> to vector<8x64xbf16>
    %cst_76 = arith.constant dense<0.000000e+00> : vector<8x128xf32>
    %317 = tpu.matmul %316, %203, %cst_76 {dimension_numbers = #tpu.dot_dimension_numbers<[1], [0], [0], [1], [0, 0, 1, 1], [], []>} : vector<8x64xbf16>, vector<64x128xbf16>, vector<8x128xf32> -> vector<8x128xf32>
    %cst_77 = arith.constant dense<0.000000e+00> : vector<8x64xf32>
    %318 = tpu.matmul %316, %204, %cst_77 {dimension_numbers = #tpu.dot_dimension_numbers<[1], [0], [0], [1], [0, 0, 1, 1], [], []>} : vector<8x64xbf16>, vector<64x64xbf16>, vector<8x64xf32> -> vector<8x64xf32>
    %319 = vector.extract_strided_slice %201 {offsets = [40, 0], sizes = [8, 128], strides = [1, 1]} : vector<64x128xf32> to vector<8x128xf32>
    %320 = arith.addf %319, %317 : vector<8x128xf32>
    %321 = arith.negf %320 : vector<8x128xf32>
    %322 = math.exp %321 : vector<8x128xf32>
    %cst_78 = arith.constant 1.000000e+00 : f32
    %323 = vector.broadcast %cst_78 : f32 to vector<8x128xf32>
    %324 = arith.addf %323, %322 : vector<8x128xf32>
    %325 = arith.divf %323, %324 : vector<8x128xf32>
    %326 = vector.extract_strided_slice %325 {offsets = [0, 0], sizes = [8, 64], strides = [1, 1]} : vector<8x128xf32> to vector<8x64xf32>
    %327 = vector.extract_strided_slice %325 {offsets = [0, 64], sizes = [8, 64], strides = [1, 1]} : vector<8x128xf32> to vector<8x64xf32>
    %328 = vector.extract_strided_slice %202 {offsets = [40, 0], sizes = [8, 64], strides = [1, 1]} : vector<64x64xf32> to vector<8x64xf32>
    %329 = arith.addf %318, %200 : vector<8x64xf32>
    %330 = arith.mulf %326, %329 : vector<8x64xf32>
    %331 = arith.addf %328, %330 : vector<8x64xf32>
    %332 = math.tanh %331 : vector<8x64xf32>
    %cst_79 = arith.constant 1.000000e+00 : f32
    %333 = vector.broadcast %cst_79 : f32 to vector<8x64xf32>
    %334 = arith.subf %333, %327 : vector<8x64xf32>
    %335 = arith.mulf %334, %332 : vector<8x64xf32>
    %336 = arith.mulf %327, %315 : vector<8x64xf32>
    %337 = arith.addf %335, %336 : vector<8x64xf32>
    %338 = arith.truncf %337 : vector<8x64xf32> to vector<8x64xbf16>
    %cst_80 = arith.constant dense<0.000000e+00> : vector<8x128xf32>
    %339 = tpu.matmul %338, %203, %cst_80 {dimension_numbers = #tpu.dot_dimension_numbers<[1], [0], [0], [1], [0, 0, 1, 1], [], []>} : vector<8x64xbf16>, vector<64x128xbf16>, vector<8x128xf32> -> vector<8x128xf32>
    %cst_81 = arith.constant dense<0.000000e+00> : vector<8x64xf32>
    %340 = tpu.matmul %338, %204, %cst_81 {dimension_numbers = #tpu.dot_dimension_numbers<[1], [0], [0], [1], [0, 0, 1, 1], [], []>} : vector<8x64xbf16>, vector<64x64xbf16>, vector<8x64xf32> -> vector<8x64xf32>
    %341 = vector.extract_strided_slice %201 {offsets = [48, 0], sizes = [8, 128], strides = [1, 1]} : vector<64x128xf32> to vector<8x128xf32>
    %342 = arith.addf %341, %339 : vector<8x128xf32>
    %343 = arith.negf %342 : vector<8x128xf32>
    %344 = math.exp %343 : vector<8x128xf32>
    %cst_82 = arith.constant 1.000000e+00 : f32
    %345 = vector.broadcast %cst_82 : f32 to vector<8x128xf32>
    %346 = arith.addf %345, %344 : vector<8x128xf32>
    %347 = arith.divf %345, %346 : vector<8x128xf32>
    %348 = vector.extract_strided_slice %347 {offsets = [0, 0], sizes = [8, 64], strides = [1, 1]} : vector<8x128xf32> to vector<8x64xf32>
    %349 = vector.extract_strided_slice %347 {offsets = [0, 64], sizes = [8, 64], strides = [1, 1]} : vector<8x128xf32> to vector<8x64xf32>
    %350 = vector.extract_strided_slice %202 {offsets = [48, 0], sizes = [8, 64], strides = [1, 1]} : vector<64x64xf32> to vector<8x64xf32>
    %351 = arith.addf %340, %200 : vector<8x64xf32>
    %352 = arith.mulf %348, %351 : vector<8x64xf32>
    %353 = arith.addf %350, %352 : vector<8x64xf32>
    %354 = math.tanh %353 : vector<8x64xf32>
    %cst_83 = arith.constant 1.000000e+00 : f32
    %355 = vector.broadcast %cst_83 : f32 to vector<8x64xf32>
    %356 = arith.subf %355, %349 : vector<8x64xf32>
    %357 = arith.mulf %356, %354 : vector<8x64xf32>
    %358 = arith.mulf %349, %337 : vector<8x64xf32>
    %359 = arith.addf %357, %358 : vector<8x64xf32>
    %360 = arith.truncf %359 : vector<8x64xf32> to vector<8x64xbf16>
    %cst_84 = arith.constant dense<0.000000e+00> : vector<8x128xf32>
    %361 = tpu.matmul %360, %203, %cst_84 {dimension_numbers = #tpu.dot_dimension_numbers<[1], [0], [0], [1], [0, 0, 1, 1], [], []>} : vector<8x64xbf16>, vector<64x128xbf16>, vector<8x128xf32> -> vector<8x128xf32>
    %cst_85 = arith.constant dense<0.000000e+00> : vector<8x64xf32>
    %362 = tpu.matmul %360, %204, %cst_85 {dimension_numbers = #tpu.dot_dimension_numbers<[1], [0], [0], [1], [0, 0, 1, 1], [], []>} : vector<8x64xbf16>, vector<64x64xbf16>, vector<8x64xf32> -> vector<8x64xf32>
    %363 = vector.extract_strided_slice %201 {offsets = [56, 0], sizes = [8, 128], strides = [1, 1]} : vector<64x128xf32> to vector<8x128xf32>
    %364 = arith.addf %363, %361 : vector<8x128xf32>
    %365 = arith.negf %364 : vector<8x128xf32>
    %366 = math.exp %365 : vector<8x128xf32>
    %cst_86 = arith.constant 1.000000e+00 : f32
    %367 = vector.broadcast %cst_86 : f32 to vector<8x128xf32>
    %368 = arith.addf %367, %366 : vector<8x128xf32>
    %369 = arith.divf %367, %368 : vector<8x128xf32>
    %370 = vector.extract_strided_slice %369 {offsets = [0, 0], sizes = [8, 64], strides = [1, 1]} : vector<8x128xf32> to vector<8x64xf32>
    %371 = vector.extract_strided_slice %369 {offsets = [0, 64], sizes = [8, 64], strides = [1, 1]} : vector<8x128xf32> to vector<8x64xf32>
    %372 = vector.extract_strided_slice %202 {offsets = [56, 0], sizes = [8, 64], strides = [1, 1]} : vector<64x64xf32> to vector<8x64xf32>
    %373 = arith.addf %362, %200 : vector<8x64xf32>
    %374 = arith.mulf %370, %373 : vector<8x64xf32>
    %375 = arith.addf %372, %374 : vector<8x64xf32>
    %376 = math.tanh %375 : vector<8x64xf32>
    %cst_87 = arith.constant 1.000000e+00 : f32
    %377 = vector.broadcast %cst_87 : f32 to vector<8x64xf32>
    %378 = arith.subf %377, %371 : vector<8x64xf32>
    %379 = arith.mulf %378, %376 : vector<8x64xf32>
    %380 = arith.mulf %371, %359 : vector<8x64xf32>
    %381 = arith.addf %379, %380 : vector<8x64xf32>
    %c0_88 = arith.constant 0 : index
    %c0_89 = arith.constant 0 : index
    %382 = vector.load %arg11[%c0_88, %c0_89] : memref<64x3xf32, #tpu.memory_space<vmem>>, vector<64x3xf32>
    %cst_90 = arith.constant dense<0.000000e+00> : vector<8x3xf32>
    %383 = tpu.matmul %381, %382, %cst_90 {dimension_numbers = #tpu.dot_dimension_numbers<[1], [0], [0], [1], [0, 0, 1, 1], [], []>} : vector<8x64xf32>, vector<64x3xf32>, vector<8x3xf32> -> vector<8x3xf32>
    %c0_91 = arith.constant 0 : index
    %c0_92 = arith.constant 0 : index
    %384 = vector.load %arg12[%c0_91, %c0_92] : memref<1x3xf32, #tpu.memory_space<vmem>>, vector<1x3xf32>
    %385 = vector.broadcast %384 : vector<1x3xf32> to vector<8x3xf32>
    %386 = arith.addf %383, %385 : vector<8x3xf32>
    %c0_93 = arith.constant 0 : index
    %c0_94 = arith.constant 0 : index
    %387 = vector.load %arg13[%c0_93, %c0_94] : memref<8x3xf32, #tpu.memory_space<vmem>>, vector<8x3xf32>
    tpu.vector_store %arg13[%c0_93, %c0_94], %386 {strides = array<i32>} : memref<8x3xf32, #tpu.memory_space<vmem>>, vector<8x3xf32>,
    return
  }
}

</mosaic_0001>

<llo_original>
// kernel: gru_model_forward.1
$region0: #{gru_model_forward.1}
  #allocation0 [shape = 'u32[]', space=smem, size = 0x4, offset = 0x4, fixed_abs, tag = 'smem constant byte address 0x4 - core index']
  #allocation1 [shape = 'u32[144,128]{1,0:T(1,128)}', space=vmem, size = 0x12000, scoped, tag = 'internal scratch']
  %s0 = inlined_call_operand.vmem [shape: f32[64,16], index: 0, kind: input, shape index: {}]
  %s1 = inlined_call_operand.vmem [shape: bf16[16,192], index: 1, kind: input, shape index: {}]
  %s2 = inlined_call_operand.vmem [shape: bf16[64,128], index: 2, kind: input, shape index: {}]
  %s3 = inlined_call_operand.vmem [shape: bf16[64,64], index: 3, kind: input, shape index: {}]
  %s4 = inlined_call_operand.vmem [shape: f32[1,192], index: 4, kind: input, shape index: {}]
  %s5 = inlined_call_operand.vmem [shape: f32[1,64], index: 5, kind: input, shape index: {}]
  %s6 = inlined_call_operand.vmem [shape: bf16[64,192], index: 6, kind: input, shape index: {}]
  %s7 = inlined_call_operand.vmem [shape: bf16[64,128], index: 7, kind: input, shape index: {}]
  %s8 = inlined_call_operand.vmem [shape: bf16[64,64], index: 8, kind: input, shape index: {}]
  %s9 = inlined_call_operand.vmem [shape: f32[1,192], index: 9, kind: input, shape index: {}]
  %s10 = inlined_call_operand.vmem [shape: f32[1,64], index: 10, kind: input, shape index: {}]
  %s11 = inlined_call_operand.vmem [shape: f32[64,3], index: 11, kind: input, shape index: {}]
  %s12 = inlined_call_operand.vmem [shape: f32[1,3], index: 12, kind: input, shape index: {}]
  %s13 = inlined_call_operand.vmem [shape: f32[8,3], index: 13, kind: output, shape index: {}]
  %s14 = sld [smem:[#allocation0]]
  $region62: #{gru_model_forward.1} parent=0
    _
  %s16 = ssub.s32 1, %s14
  %s17 = scalar_select 0, %s16, %s14
  // Predicated region
  $region2: #{gru_model_forward.1} parent=0 // pred_check
    _
  $region3: #{gru_model_forward.1} parent=0 // pred_check_branch
    %19 = sbr.rel (0) target = $region5
  $region4: #{gru_model_forward.1} parent=0 // pred_region
    _
  $region5: #{gru_model_forward.1} parent=0 // pred_fallthru
    _
  // Predicated region
  $region6: #{gru_model_forward.1} parent=0 // pred_check
    _
  $region7: #{gru_model_forward.1} parent=0 // pred_check_branch
    %21 = sbr.rel (0) target = $region9
  $region8: #{gru_model_forward.1} parent=0 // pred_region
    _
  $region9: #{gru_model_forward.1} parent=0 // pred_fallthru
    _
  // Predicated region
  $region10: #{gru_model_forward.1} parent=0 // pred_check
    _
  $region11: #{gru_model_forward.1} parent=0 // pred_check_branch
    %23 = sbr.rel (0) target = $region13
  $region12: #{gru_model_forward.1} parent=0 // pred_region
    _
  $region13: #{gru_model_forward.1} parent=0 // pred_fallthru
    _
  // Predicated region
  $region14: #{gru_model_forward.1} parent=0 // pred_check
    _
  $region15: #{gru_model_forward.1} parent=0 // pred_check_branch
    %25 = sbr.rel (0) target = $region17
  $region16: #{gru_model_forward.1} parent=0 // pred_region
    _
  $region17: #{gru_model_forward.1} parent=0 // pred_fallthru
    _
  // Predicated region
  $region18: #{gru_model_forward.1} parent=0 // pred_check
    _
  $region19: #{gru_model_forward.1} parent=0 // pred_check_branch
    %27 = sbr.rel (0) target = $region21
  $region20: #{gru_model_forward.1} parent=0 // pred_region
    _
  $region21: #{gru_model_forward.1} parent=0 // pred_fallthru
    _
  // Predicated region
  $region22: #{gru_model_forward.1} parent=0 // pred_check
    _
  $region23: #{gru_model_forward.1} parent=0 // pred_check_branch
    %29 = sbr.rel (0) target = $region25
  $region24: #{gru_model_forward.1} parent=0 // pred_region
    _
  $region25: #{gru_model_forward.1} parent=0 // pred_fallthru
    _
  // Predicated region
  $region26: #{gru_model_forward.1} parent=0 // pred_check
    _
  $region27: #{gru_model_forward.1} parent=0 // pred_check_branch
    %31 = sbr.rel (0) target = $region29
  $region28: #{gru_model_forward.1} parent=0 // pred_region
    _
  $region29: #{gru_model_forward.1} parent=0 // pred_fallthru
    _
  // Predicated region
  $region30: #{gru_model_forward.1} parent=0 // pred_check
    _
  $region31: #{gru_model_forward.1} parent=0 // pred_check_branch
    %33 = sbr.rel (0) target = $region33
  $region32: #{gru_model_forward.1} parent=0 // pred_region
    _
  $region33: #{gru_model_forward.1} parent=0 // pred_fallthru
    _
  // Predicated region
  $region34: #{gru_model_forward.1} parent=0 // pred_check
    _
  $region35: #{gru_model_forward.1} parent=0 // pred_check_branch
    %35 = sbr.rel (0) target = $region37
  $region36: #{gru_model_forward.1} parent=0 // pred_region
    _
  $region37: #{gru_model_forward.1} parent=0 // pred_fallthru
    _
  // Predicated region
  $region38: #{gru_model_forward.1} parent=0 // pred_check
    _
  $region39: #{gru_model_forward.1} parent=0 // pred_check_branch
    %37 = sbr.rel (0) target = $region41
  $region40: #{gru_model_forward.1} parent=0 // pred_region
    _
  $region41: #{gru_model_forward.1} parent=0 // pred_fallthru
    _
  // Predicated region
  $region42: #{gru_model_forward.1} parent=0 // pred_check
    _
  $region43: #{gru_model_forward.1} parent=0 // pred_check_branch
    %39 = sbr.rel (0) target = $region45
  $region44: #{gru_model_forward.1} parent=0 // pred_region
    _
  $region45: #{gru_model_forward.1} parent=0 // pred_fallthru
    _
  // Predicated region
  $region46: #{gru_model_forward.1} parent=0 // pred_check
    _
  $region47: #{gru_model_forward.1} parent=0 // pred_check_branch
    %41 = sbr.rel (0) target = $region49
  $region48: #{gru_model_forward.1} parent=0 // pred_region
    _
  $region49: #{gru_model_forward.1} parent=0 // pred_fallthru
    _
  // Predicated region
  $region50: #{gru_model_forward.1} parent=0 // pred_check
    _
  $region51: #{gru_model_forward.1} parent=0 // pred_check_branch
    %43 = sbr.rel (0) target = $region53
  $region52: #{gru_model_forward.1} parent=0 // pred_region
    _
  $region53: #{gru_model_forward.1} parent=0 // pred_fallthru
    _
  %v45 = vld [vmem:[%s0] sm:$0xff]
  %v46 = vld [vmem:[%s0 + $0x8] sm:$0xff]
  %v47 = vld [vmem:[%s0 + $0x10] sm:$0xff]
  %v48 = vld [vmem:[%s0 + $0x18] sm:$0xff]
  %v49 = vld [vmem:[%s0 + $0x20] sm:$0xff]
  %v50 = vld [vmem:[%s0 + $0x28] sm:$0xff]
  %v51 = vld [vmem:[%s0 + $0x30] sm:$0xff]
  %v52 = vld [vmem:[%s0 + $0x38] sm:$0xff]
  %v53 = vpack.c.bf16 %v46, %v45
  %v54 = vpack.c.bf16 %v48, %v47
  %v55 = vpack.c.bf16 %v50, %v49
  %v56 = vpack.c.bf16 %v52, %v51
  %v57 = vld [vmem:[%s1] sm:$0xff]
  %v58 = vld [vmem:[%s1 + $0x8] sm:$0xff]
  %v59 = vld [vmem:[%s4] sm:$0x3]
  %v61 = vlaneseq
  %v62 = vshrl.u32 %v61, 7
  %v63 = vsub.s32 0, %v62
  %v64 = vrot.slane %v59, %v63
  %v65 = vlaneseq
  %v66 = vshrl.u32 %v65, 7
  %v67 = vsub.s32 1, %v66
  %v68 = vrot.slane %v59, %v67
  %v73 = vunpack.c.l.b16 %v57
  %v74 = vunpack.c.h.b16 %v57
  %v75 = vunpack.c.l.b16 %v58
  %v76 = vunpack.c.h.b16 %v58
  %v77 = vpack.c.b16 %v75, %v73
  %v78 = vpack.c.b16 %v76, %v74
  %vm81 = vcmask 130048
  %v83 = vsel %vm81, %v53, 0
  %v86 = vsel %vm81, %v54, 0
  %v89 = vsel %vm81, %v55, 0
  %v92 = vsel %vm81, %v56, 0
  %94 = vmatprep.subr.bf16.mxu0 %v78
  %95 = vmatpush1.bf16.msra.mxu0 %v77
  %96 = vmatprep.subr.bf16.mxu0 0
  %97 = vmatpush1.bf16.msra.mxu0 0
  %98 = vmatprep.subr.bf16.mxu0 0
  %99 = vmatpush1.bf16.msra.mxu0 0
  %100 = vmatprep.subr.bf16.mxu0 0
  %101 = vmatpush1.bf16.msra.mxu0 0
  %102 = vmatprep.subr.bf16.mxu0 0
  %103 = vmatpush1.bf16.msra.mxu0 0
  %104 = vmatprep.subr.bf16.mxu0 0
  %105 = vmatpush1.bf16.msra.mxu0 0
  %106 = vmatprep.subr.bf16.mxu0 0
  %107 = vmatpush1.bf16.msra.mxu0 0
  %108 = vmatprep.subr.bf16.mxu0 0
  %109 = vmatpush1.bf16.msra.mxu0 0
  %110 = vmatprep.subr.bf16.mxu0 0
  %111 = vmatpush1.bf16.msra.mxu0 0
  %112 = vmatprep.subr.bf16.mxu0 0
  %113 = vmatpush1.bf16.msra.mxu0 0
  %114 = vmatprep.subr.bf16.mxu0 0
  %115 = vmatpush1.bf16.msra.mxu0 0
  %116 = vmatprep.subr.bf16.mxu0 0
  %117 = vmatpush1.bf16.msra.mxu0 0
  %118 = vmatprep.subr.bf16.mxu0 0
  %119 = vmatpush1.bf16.msra.mxu0 0
  %120 = vmatprep.subr.bf16.mxu0 0
  %121 = vmatpush1.bf16.msra.mxu0 0
  %122 = vmatprep.subr.bf16.mxu0 0
  %123 = vmatpush1.bf16.msra.mxu0 0
  %124 = vmatprep.subr.bf16.mxu0 0
  %125 = vmatpush1.bf16.msra.mxu0 0
  %126 = vmatprep.mubr.bf16.mxu0 0
  %127 = vmatmul.mubr.bf16.gmra.mrb[0].mxu0 %v83
  %v128 = vpop.f32.mrb[0].mxu0
  %v129 = vadd.f32 %v64, %v128
  %v130 = vpop.f32.mrb[0].mxu0
  %v131 = vadd.f32 %v68, %v130
  %v132 = vpop.f32.mrb[0].mxu0
  %v133 = vadd.f32 %v64, %v132
  %v134 = vpop.f32.mrb[0].mxu0
  %v135 = vadd.f32 %v68, %v134
  %136 = vmatprep.mubr.bf16.mxu0 0
  %137 = vmatmul.mubr.bf16.gmra.mrb[0].mxu0 %v86
  %v138 = vpop.f32.mrb[0].mxu0
  %v139 = vadd.f32 %v64, %v138
  %v140 = vpop.f32.mrb[0].mxu0
  %v141 = vadd.f32 %v68, %v140
  %v142 = vpop.f32.mrb[0].mxu0
  %v143 = vadd.f32 %v64, %v142
  %v144 = vpop.f32.mrb[0].mxu0
  %v145 = vadd.f32 %v68, %v144
  %146 = vmatprep.mubr.bf16.mxu0 0
  %147 = vmatmul.mubr.bf16.gmra.mrb[0].mxu0 %v89
  %v148 = vpop.f32.mrb[0].mxu0
  %v149 = vadd.f32 %v64, %v148
  %v150 = vpop.f32.mrb[0].mxu0
  %v151 = vadd.f32 %v68, %v150
  %v152 = vpop.f32.mrb[0].mxu0
  %v153 = vadd.f32 %v64, %v152
  %v154 = vpop.f32.mrb[0].mxu0
  %v155 = vadd.f32 %v68, %v154
  %156 = vmatprep.mubr.bf16.mxu0 0
  %157 = vmatmul.mubr.bf16.gmra.mrb[0].mxu0 %v92
  %v158 = vpop.f32.mrb[0].mxu0
  %v159 = vadd.f32 %v64, %v158
  %v160 = vpop.f32.mrb[0].mxu0
  %v161 = vadd.f32 %v68, %v160
  %v162 = vpop.f32.mrb[0].mxu0
  %v163 = vadd.f32 %v64, %v162
  %v164 = vpop.f32.mrb[0].mxu0
  %v165 = vadd.f32 %v68, %v164
  %166 = vdwg.mxu0
  %v167 = vld [vmem:[%s5] sm:$0x1]
  %v169 = vlaneseq
  %v170 = vshrl.u32 %v169, 7
  %v171 = vsub.s32 0, %v170
  %v172 = vrot.slane %v167, %v171
  %v174 = vld [vmem:[%s2] sm:$0xf]
  %v175 = vld [vmem:[%s2 + $0x4] sm:$0xf]
  %v176 = vld [vmem:[%s2 + $0x8] sm:$0xf]
  %v177 = vld [vmem:[%s2 + $0xc] sm:$0xf]
  %v178 = vld [vmem:[%s2 + $0x10] sm:$0xf]
  %v179 = vld [vmem:[%s2 + $0x14] sm:$0xf]
  %v180 = vld [vmem:[%s2 + $0x18] sm:$0xf]
  %v181 = vld [vmem:[%s2 + $0x1c] sm:$0xf]
  %v182 = vld [vmem:[%s3] sm:$0xf]
  %v183 = vld [vmem:[%s3 + $0x4] sm:$0xf]
  %v184 = vld [vmem:[%s3 + $0x8] sm:$0xf]
  %v185 = vld [vmem:[%s3 + $0xc] sm:$0xf]
  %v186 = vld [vmem:[%s3 + $0x10] sm:$0xf]
  %v187 = vld [vmem:[%s3 + $0x14] sm:$0xf]
  %v188 = vld [vmem:[%s3 + $0x18] sm:$0xf]
  %v189 = vld [vmem:[%s3 + $0x1c] sm:$0xf]
  %v198 = vunpack.c.l.b16 %v174
  %v199 = vunpack.c.l.b16 %v175
  %v200 = vunpack.c.l.b16 %v176
  %v201 = vunpack.c.l.b16 %v177
  %v202 = vunpack.c.l.b16 %v178
  %v203 = vunpack.c.l.b16 %v179
  %v204 = vunpack.c.l.b16 %v180
  %v205 = vunpack.c.l.b16 %v181
  %v206 = vpack.c.b16 %v199, %v198
  %v207 = vpack.c.b16 %v201, %v200
  %v208 = vpack.c.b16 %v203, %v202
  %v209 = vpack.c.b16 %v205, %v204
  %vm214 = vcmask 523264
  %v216 = vsel %vm214, 0, 0
  %218 = vmatprep.subr.bf16.mxu0 0
  %219 = vmatpush1.bf16.msra.mxu0 %v206
  %220 = vmatprep.subr.bf16.mxu0 0
  %221 = vmatpush1.bf16.msra.mxu0 %v207
  %222 = vmatprep.subr.bf16.mxu0 0
  %223 = vmatpush1.bf16.msra.mxu0 %v208
  %224 = vmatprep.subr.bf16.mxu0 0
  %225 = vmatpush1.bf16.msra.mxu0 %v209
  %226 = vmatprep.subr.bf16.mxu0 0
  %227 = vmatpush1.bf16.msra.mxu0 0
  %228 = vmatprep.subr.bf16.mxu0 0
  %229 = vmatpush1.bf16.msra.mxu0 0
  %230 = vmatprep.subr.bf16.mxu0 0
  %231 = vmatpush1.bf16.msra.mxu0 0
  %232 = vmatprep.subr.bf16.mxu0 0
  %233 = vmatpush1.bf16.msra.mxu0 0
  %234 = vmatprep.subr.bf16.mxu0 0
  %235 = vmatpush1.bf16.msra.mxu0 0
  %236 = vmatprep.subr.bf16.mxu0 0
  %237 = vmatpush1.bf16.msra.mxu0 0
  %238 = vmatprep.subr.bf16.mxu0 0
  %239 = vmatpush1.bf16.msra.mxu0 0
  %240 = vmatprep.subr.bf16.mxu0 0
  %241 = vmatpush1.bf16.msra.mxu0 0
  %242 = vmatprep.subr.bf16.mxu0 0
  %243 = vmatpush1.bf16.msra.mxu0 0
  %244 = vmatprep.subr.bf16.mxu0 0
  %245 = vmatpush1.bf16.msra.mxu0 0
  %246 = vmatprep.subr.bf16.mxu0 0
  %247 = vmatpush1.bf16.msra.mxu0 0
  %248 = vmatprep.subr.bf16.mxu0 0
  %249 = vmatpush1.bf16.msra.mxu0 0
  %250 = vmatprep.mubr.bf16.mxu0 0
  %251 = vmatmul.mubr.bf16.gmra.mrb[0].mxu0 %v216
  %v252 = vpop.f32.mrb[0].mxu0
  %v253 = vadd.f32 0.0, %v252
  %v254 = vpop.f32.mrb[0].mxu0
  %v255 = vpop.f32.mrb[0].mxu0
  %v256 = vpop.f32.mrb[0].mxu0
  %257 = vdwg.mxu0
  %v258 = vadd.f32 %v129, %v253
  %v259 = vxor.u32 %v258, 2147483648
  %v260 = vmul.f32 %v259, 1.442695
  %v261 = vpow.pop %v260
  %v262 = vadd.f32 %v261, 1.0
  %v263 = vrcp.pop %v262
  %v264 = vmul.f32 1.0, %v263
  %v273 = vunpack.c.l.b16 %v182
  %v274 = vunpack.c.l.b16 %v183
  %v275 = vunpack.c.l.b16 %v184
  %v276 = vunpack.c.l.b16 %v185
  %v277 = vunpack.c.l.b16 %v186
  %v278 = vunpack.c.l.b16 %v187
  %v279 = vunpack.c.l.b16 %v188
  %v280 = vunpack.c.l.b16 %v189
  %v281 = vpack.c.b16 %v274, %v273
  %v282 = vpack.c.b16 %v276, %v275
  %v283 = vpack.c.b16 %v278, %v277
  %v284 = vpack.c.b16 %v280, %v279
  %289 = vmatprep.subr.bf16.mxu0 0
  %290 = vmatpush1.bf16.msra.mxu0 %v281
  %291 = vmatprep.subr.bf16.mxu0 0
  %292 = vmatpush1.bf16.msra.mxu0 %v282
  %293 = vmatprep.subr.bf16.mxu0 0
  %294 = vmatpush1.bf16.msra.mxu0 %v283
  %295 = vmatprep.subr.bf16.mxu0 0
  %296 = vmatpush1.bf16.msra.mxu0 %v284
  %297 = vmatprep.subr.bf16.mxu0 0
  %298 = vmatpush1.bf16.msra.mxu0 0
  %299 = vmatprep.subr.bf16.mxu0 0
  %300 = vmatpush1.bf16.msra.mxu0 0
  %301 = vmatprep.subr.bf16.mxu0 0
  %302 = vmatpush1.bf16.msra.mxu0 0
  %303 = vmatprep.subr.bf16.mxu0 0
  %304 = vmatpush1.bf16.msra.mxu0 0
  %305 = vmatprep.subr.bf16.mxu0 0
  %306 = vmatpush1.bf16.msra.mxu0 0
  %307 = vmatprep.subr.bf16.mxu0 0
  %308 = vmatpush1.bf16.msra.mxu0 0
  %309 = vmatprep.subr.bf16.mxu0 0
  %310 = vmatpush1.bf16.msra.mxu0 0
  %311 = vmatprep.subr.bf16.mxu0 0
  %312 = vmatpush1.bf16.msra.mxu0 0
  %313 = vmatprep.subr.bf16.mxu0 0
  %314 = vmatpush1.bf16.msra.mxu0 0
  %315 = vmatprep.subr.bf16.mxu0 0
  %316 = vmatpush1.bf16.msra.mxu0 0
  %317 = vmatprep.subr.bf16.mxu0 0
  %318 = vmatpush1.bf16.msra.mxu0 0
  %319 = vmatprep.subr.bf16.mxu0 0
  %320 = vmatpush1.bf16.msra.mxu0 0
  %321 = vmatprep.mubr.bf16.mxu0 0
  %322 = vmatmul.mubr.bf16.gmra.mrb[0].mxu0 %v216
  %v323 = vpop.f32.mrb[0].mxu0
  %v324 = vadd.f32 %v172, %v323
  %v325 = vpop.f32.mrb[0].mxu0
  %v326 = vpop.f32.mrb[0].mxu0
  %v327 = vpop.f32.mrb[0].mxu0
  %328 = vdwg.mxu0
  %v329 = vmul.f32 %v264, %v324
  %v330 = vadd.f32 %v131, %v329
  %v331 = vtanh.pop %v330
  %v332 = vsub.f32 1.0, %v264
  %334 = vrot.lane.b32.xlu0 %v331, 64
  %v335 = vpop.permute.xlu0 %334
  %v337 = vmul.f32 %v332, %v335
  %v338 = vmul.f32 %v264, 0.0
  %v339 = vadd.f32 %v337, %v338
  %v340 = vpack.c.bf16 %v339, %v339
  %342 = vrot.lane.b32.xlu0 %v340, 64
  %v343 = vpop.permute.xlu0 %342
  %v345 = vsel %vm214, %v343, 0
  %347 = vmatprep.subr.bf16.mxu0 0
  %348 = vmatpush1.bf16.msra.mxu0 %v206
  %349 = vmatprep.subr.bf16.mxu0 0
  %350 = vmatpush1.bf16.msra.mxu0 %v207
  %351 = vmatprep.subr.bf16.mxu0 0
  %352 = vmatpush1.bf16.msra.mxu0 %v208
  %353 = vmatprep.subr.bf16.mxu0 0
  %354 = vmatpush1.bf16.msra.mxu0 %v209
  %355 = vmatprep.subr.bf16.mxu0 0
  %356 = vmatpush1.bf16.msra.mxu0 0
  %357 = vmatprep.subr.bf16.mxu0 0
  %358 = vmatpush1.bf16.msra.mxu0 0
  %359 = vmatprep.subr.bf16.mxu0 0
  %360 = vmatpush1.bf16.msra.mxu0 0
  %361 = vmatprep.subr.bf16.mxu0 0
  %362 = vmatpush1.bf16.msra.mxu0 0
  %363 = vmatprep.subr.bf16.mxu0 0
  %364 = vmatpush1.bf16.msra.mxu0 0
  %365 = vmatprep.subr.bf16.mxu0 0
  %366 = vmatpush1.bf16.msra.mxu0 0
  %367 = vmatprep.subr.bf16.mxu0 0
  %368 = vmatpush1.bf16.msra.mxu0 0
  %369 = vmatprep.subr.bf16.mxu0 0
  %370 = vmatpush1.bf16.msra.mxu0 0
  %371 = vmatprep.subr.bf16.mxu0 0
  %372 = vmatpush1.bf16.msra.mxu0 0
  %373 = vmatprep.subr.bf16.mxu0 0
  %374 = vmatpush1.bf16.msra.mxu0 0
  %375 = vmatprep.subr.bf16.mxu0 0
  %376 = vmatpush1.bf16.msra.mxu0 0
  %377 = vmatprep.subr.bf16.mxu0 0
  %378 = vmatpush1.bf16.msra.mxu0 0
  %379 = vmatprep.mubr.bf16.mxu0 0
  %380 = vmatmul.mubr.bf16.gmra.mrb[0].mxu0 %v345
  %v381 = vpop.f32.mrb[0].mxu0
  %v382 = vadd.f32 0.0, %v381
  %v383 = vpop.f32.mrb[0].mxu0
  %v384 = vpop.f32.mrb[0].mxu0
  %v385 = vpop.f32.mrb[0].mxu0
  %386 = vdwg.mxu0
  %v387 = vadd.f32 %v133, %v382
  %v388 = vxor.u32 %v387, 2147483648
  %v389 = vmul.f32 %v388, 1.442695
  %v390 = vpow.pop %v389
  %v391 = vadd.f32 %v390, 1.0
  %v392 = vrcp.pop %v391
  %v393 = vmul.f32 1.0, %v392
  %394 = vmatprep.subr.bf16.mxu0 0
  %395 = vmatpush1.bf16.msra.mxu0 %v281
  %396 = vmatprep.subr.bf16.mxu0 0
  %397 = vmatpush1.bf16.msra.mxu0 %v282
  %398 = vmatprep.subr.bf16.mxu0 0
  %399 = vmatpush1.bf16.msra.mxu0 %v283
  %400 = vmatprep.subr.bf16.mxu0 0
  %401 = vmatpush1.bf16.msra.mxu0 %v284
  %402 = vmatprep.subr.bf16.mxu0 0
  %403 = vmatpush1.bf16.msra.mxu0 0
  %404 = vmatprep.subr.bf16.mxu0 0
  %405 = vmatpush1.bf16.msra.mxu0 0
  %406 = vmatprep.subr.bf16.mxu0 0
  %407 = vmatpush1.bf16.msra.mxu0 0
  %408 = vmatprep.subr.bf16.mxu0 0
  %409 = vmatpush1.bf16.msra.mxu0 0
  %410 = vmatprep.subr.bf16.mxu0 0
  %411 = vmatpush1.bf16.msra.mxu0 0
  %412 = vmatprep.subr.bf16.mxu0 0
  %413 = vmatpush1.bf16.msra.mxu0 0
  %414 = vmatprep.subr.bf16.mxu0 0
  %415 = vmatpush1.bf16.msra.mxu0 0
  %416 = vmatprep.subr.bf16.mxu0 0
  %417 = vmatpush1.bf16.msra.mxu0 0
  %418 = vmatprep.subr.bf16.mxu0 0
  %419 = vmatpush1.bf16.msra.mxu0 0
  %420 = vmatprep.subr.bf16.mxu0 0
  %421 = vmatpush1.bf16.msra.mxu0 0
  %422 = vmatprep.subr.bf16.mxu0 0
  %423 = vmatpush1.bf16.msra.mxu0 0
  %424 = vmatprep.subr.bf16.mxu0 0
  %425 = vmatpush1.bf16.msra.mxu0 0
  %426 = vmatprep.mubr.bf16.mxu0 0
  %427 = vmatmul.mubr.bf16.gmra.mrb[0].mxu0 %v345
  %v428 = vpop.f32.mrb[0].mxu0
  %v429 = vadd.f32 %v172, %v428
  %v430 = vpop.f32.mrb[0].mxu0
  %v431 = vpop.f32.mrb[0].mxu0
  %v432 = vpop.f32.mrb[0].mxu0
  %433 = vdwg.mxu0
  %v434 = vmul.f32 %v393, %v429
  %v435 = vadd.f32 %v135, %v434
  %v436 = vtanh.pop %v435
  %v437 = vsub.f32 1.0, %v393
  %439 = vrot.lane.b32.xlu0 %v436, 64
  %v440 = vpop.permute.xlu0 %439
  %v442 = vmul.f32 %v437, %v440
  %v443 = vmul.f32 %v393, %v339
  %v444 = vadd.f32 %v442, %v443
  %v445 = vpack.c.bf16 %v444, %v444
  %447 = vrot.lane.b32.xlu0 %v445, 64
  %v448 = vpop.permute.xlu0 %447
  %v450 = vsel %vm214, %v448, 0
  %452 = vmatprep.subr.bf16.mxu0 0
  %453 = vmatpush1.bf16.msra.mxu0 %v206
  %454 = vmatprep.subr.bf16.mxu0 0
  %455 = vmatpush1.bf16.msra.mxu0 %v207
  %456 = vmatprep.subr.bf16.mxu0 0
  %457 = vmatpush1.bf16.msra.mxu0 %v208
  %458 = vmatprep.subr.bf16.mxu0 0
  %459 = vmatpush1.bf16.msra.mxu0 %v209
  %460 = vmatprep.subr.bf16.mxu0 0
  %461 = vmatpush1.bf16.msra.mxu0 0
  %462 = vmatprep.subr.bf16.mxu0 0
  %463 = vmatpush1.bf16.msra.mxu0 0
  %464 = vmatprep.subr.bf16.mxu0 0
  %465 = vmatpush1.bf16.msra.mxu0 0
  %466 = vmatprep.subr.bf16.mxu0 0
  %467 = vmatpush1.bf16.msra.mxu0 0
  %468 = vmatprep.subr.bf16.mxu0 0
  %469 = vmatpush1.bf16.msra.mxu0 0
  %470 = vmatprep.subr.bf16.mxu0 0
  %471 = vmatpush1.bf16.msra.mxu0 0
  %472 = vmatprep.subr.bf16.mxu0 0
  %473 = vmatpush1.bf16.msra.mxu0 0
  %474 = vmatprep.subr.bf16.mxu0 0
  %475 = vmatpush1.bf16.msra.mxu0 0
  %476 = vmatprep.subr.bf16.mxu0 0
  %477 = vmatpush1.bf16.msra.mxu0 0
  %478 = vmatprep.subr.bf16.mxu0 0
  %479 = vmatpush1.bf16.msra.mxu0 0
  %480 = vmatprep.subr.bf16.mxu0 0
  %481 = vmatpush1.bf16.msra.mxu0 0
  %482 = vmatprep.subr.bf16.mxu0 0
  %483 = vmatpush1.bf16.msra.mxu0 0
  %484 = vmatprep.mubr.bf16.mxu0 0
  %485 = vmatmul.mubr.bf16.gmra.mrb[0].mxu0 %v450
  %v486 = vpop.f32.mrb[0].mxu0
  %v487 = vadd.f32 0.0, %v486
  %v488 = vpop.f32.mrb[0].mxu0
  %v489 = vpop.f32.mrb[0].mxu0
  %v490 = vpop.f32.mrb[0].mxu0
  %491 = vdwg.mxu0
  %v492 = vadd.f32 %v139, %v487
  %v493 = vxor.u32 %v492, 2147483648
  %v494 = vmul.f32 %v493, 1.442695
  %v495 = vpow.pop %v494
  %v496 = vadd.f32 %v495, 1.0
  %v497 = vrcp.pop %v496
  %v498 = vmul.f32 1.0, %v497
  %499 = vmatprep.subr.bf16.mxu0 0
  %500 = vmatpush1.bf16.msra.mxu0 %v281
  %501 = vmatprep.subr.bf16.mxu0 0
  %502 = vmatpush1.bf16.msra.mxu0 %v282
  %503 = vmatprep.subr.bf16.mxu0 0
  %504 = vmatpush1.bf16.msra.mxu0 %v283
  %505 = vmatprep.subr.bf16.mxu0 0
  %506 = vmatpush1.bf16.msra.mxu0 %v284
  %507 = vmatprep.subr.bf16.mxu0 0
  %508 = vmatpush1.bf16.msra.mxu0 0
  %509 = vmatprep.subr.bf16.mxu0 0
  %510 = vmatpush1.bf16.msra.mxu0 0
  %511 = vmatprep.subr.bf16.mxu0 0
  %512 = vmatpush1.bf16.msra.mxu0 0
  %513 = vmatprep.subr.bf16.mxu0 0
  %514 = vmatpush1.bf16.msra.mxu0 0
  %515 = vmatprep.subr.bf16.mxu0 0
  %516 = vmatpush1.bf16.msra.mxu0 0
  %517 = vmatprep.subr.bf16.mxu0 0
  %518 = vmatpush1.bf16.msra.mxu0 0
  %519 = vmatprep.subr.bf16.mxu0 0
  %520 = vmatpush1.bf16.msra.mxu0 0
  %521 = vmatprep.subr.bf16.mxu0 0
  %522 = vmatpush1.bf16.msra.mxu0 0
  %523 = vmatprep.subr.bf16.mxu0 0
  %524 = vmatpush1.bf16.msra.mxu0 0
  %525 = vmatprep.subr.bf16.mxu0 0
  %526 = vmatpush1.bf16.msra.mxu0 0
  %527 = vmatprep.subr.bf16.mxu0 0
  %528 = vmatpush1.bf16.msra.mxu0 0
  %529 = vmatprep.subr.bf16.mxu0 0
  %530 = vmatpush1.bf16.msra.mxu0 0
  %531 = vmatprep.mubr.bf16.mxu0 0
  %532 = vmatmul.mubr.bf16.gmra.mrb[0].mxu0 %v450
  %v533 = vpop.f32.mrb[0].mxu0
  %v534 = vadd.f32 %v172, %v533
  %v535 = vpop.f32.mrb[0].mxu0
  %v536 = vpop.f32.mrb[0].mxu0
  %v537 = vpop.f32.mrb[0].mxu0
  %538 = vdwg.mxu0
  %v539 = vmul.f32 %v498, %v534
  %v540 = vadd.f32 %v141, %v539
  %v541 = vtanh.pop %v540
  %v542 = vsub.f32 1.0, %v498
  %544 = vrot.lane.b32.xlu0 %v541, 64
  %v545 = vpop.permute.xlu0 %544
  %v547 = vmul.f32 %v542, %v545
  %v548 = vmul.f32 %v498, %v444
  %v549 = vadd.f32 %v547, %v548
  %v550 = vpack.c.bf16 %v549, %v549
  %552 = vrot.lane.b32.xlu0 %v550, 64
  %v553 = vpop.permute.xlu0 %552
  %v555 = vsel %vm214, %v553, 0
  %557 = vmatprep.subr.bf16.mxu0 0
  %558 = vmatpush1.bf16.msra.mxu0 %v206
  %559 = vmatprep.subr.bf16.mxu0 0
  %560 = vmatpush1.bf16.msra.mxu0 %v207
  %561 = vmatprep.subr.bf16.mxu0 0
  %562 = vmatpush1.bf16.msra.mxu0 %v208
  %563 = vmatprep.subr.bf16.mxu0 0
  %564 = vmatpush1.bf16.msra.mxu0 %v209
  %565 = vmatprep.subr.bf16.mxu0 0
  %566 = vmatpush1.bf16.msra.mxu0 0
  %567 = vmatprep.subr.bf16.mxu0 0
  %568 = vmatpush1.bf16.msra.mxu0 0
  %569 = vmatprep.subr.bf16.mxu0 0
  %570 = vmatpush1.bf16.msra.mxu0 0
  %571 = vmatprep.subr.bf16.mxu0 0
  %572 = vmatpush1.bf16.msra.mxu0 0
  %573 = vmatprep.subr.bf16.mxu0 0
  %574 = vmatpush1.bf16.msra.mxu0 0
  %575 = vmatprep.subr.bf16.mxu0 0
  %576 = vmatpush1.bf16.msra.mxu0 0
  %577 = vmatprep.subr.bf16.mxu0 0
  %578 = vmatpush1.bf16.msra.mxu0 0
  %579 = vmatprep.subr.bf16.mxu0 0
  %580 = vmatpush1.bf16.msra.mxu0 0
  %581 = vmatprep.subr.bf16.mxu0 0
  %582 = vmatpush1.bf16.msra.mxu0 0
  %583 = vmatprep.subr.bf16.mxu0 0
  %584 = vmatpush1.bf16.msra.mxu0 0
  %585 = vmatprep.subr.bf16.mxu0 0
  %586 = vmatpush1.bf16.msra.mxu0 0
  %587 = vmatprep.subr.bf16.mxu0 0
  %588 = vmatpush1.bf16.msra.mxu0 0
  %589 = vmatprep.mubr.bf16.mxu0 0
  %590 = vmatmul.mubr.bf16.gmra.mrb[0].mxu0 %v555
  %v591 = vpop.f32.mrb[0].mxu0
  %v592 = vadd.f32 0.0, %v591
  %v593 = vpop.f32.mrb[0].mxu0
  %v594 = vpop.f32.mrb[0].mxu0
  %v595 = vpop.f32.mrb[0].mxu0
  %596 = vdwg.mxu0
  %v597 = vadd.f32 %v143, %v592
  %v598 = vxor.u32 %v597, 2147483648
  %v599 = vmul.f32 %v598, 1.442695
  %v600 = vpow.pop %v599
  %v601 = vadd.f32 %v600, 1.0
  %v602 = vrcp.pop %v601
  %v603 = vmul.f32 1.0, %v602
  %604 = vmatprep.subr.bf16.mxu0 0
  %605 = vmatpush1.bf16.msra.mxu0 %v281
  %606 = vmatprep.subr.bf16.mxu0 0
  %607 = vmatpush1.bf16.msra.mxu0 %v282
  %608 = vmatprep.subr.bf16.mxu0 0
  %609 = vmatpush1.bf16.msra.mxu0 %v283
  %610 = vmatprep.subr.bf16.mxu0 0
  %611 = vmatpush1.bf16.msra.mxu0 %v284
  %612 = vmatprep.subr.bf16.mxu0 0
  %613 = vmatpush1.bf16.msra.mxu0 0
  %614 = vmatprep.subr.bf16.mxu0 0
  %615 = vmatpush1.bf16.msra.mxu0 0
  %616 = vmatprep.subr.bf16.mxu0 0
  %617 = vmatpush1.bf16.msra.mxu0 0
  %618 = vmatprep.subr.bf16.mxu0 0
  %619 = vmatpush1.bf16.msra.mxu0 0
  %620 = vmatprep.subr.bf16.mxu0 0
  %621 = vmatpush1.bf16.msra.mxu0 0
  %622 = vmatprep.subr.bf16.mxu0 0
  %623 = vmatpush1.bf16.msra.mxu0 0
  %624 = vmatprep.subr.bf16.mxu0 0
  %625 = vmatpush1.bf16.msra.mxu0 0
  %626 = vmatprep.subr.bf16.mxu0 0
  %627 = vmatpush1.bf16.msra.mxu0 0
  %628 = vmatprep.subr.bf16.mxu0 0
  %629 = vmatpush1.bf16.msra.mxu0 0
  %630 = vmatprep.subr.bf16.mxu0 0
  %631 = vmatpush1.bf16.msra.mxu0 0
  %632 = vmatprep.subr.bf16.mxu0 0
  %633 = vmatpush1.bf16.msra.mxu0 0
  %634 = vmatprep.subr.bf16.mxu0 0
  %635 = vmatpush1.bf16.msra.mxu0 0
  %636 = vmatprep.mubr.bf16.mxu0 0
  %637 = vmatmul.mubr.bf16.gmra.mrb[0].mxu0 %v555
  %v638 = vpop.f32.mrb[0].mxu0
  %v639 = vadd.f32 %v172, %v638
  %v640 = vpop.f32.mrb[0].mxu0
  %v641 = vpop.f32.mrb[0].mxu0
  %v642 = vpop.f32.mrb[0].mxu0
  %643 = vdwg.mxu0
  %v644 = vmul.f32 %v603, %v639
  %v645 = vadd.f32 %v145, %v644
  %v646 = vtanh.pop %v645
  %v647 = vsub.f32 1.0, %v603
  %649 = vrot.lane.b32.xlu0 %v646, 64
  %v650 = vpop.permute.xlu0 %649
  %v652 = vmul.f32 %v647, %v650
  %v653 = vmul.f32 %v603, %v549
  %v654 = vadd.f32 %v652, %v653
  %v655 = vpack.c.bf16 %v654, %v654
  %657 = vrot.lane.b32.xlu0 %v655, 64
  %v658 = vpop.permute.xlu0 %657
  %v660 = vsel %vm214, %v658, 0
  %662 = vmatprep.subr.bf16.mxu0 0
  %663 = vmatpush1.bf16.msra.mxu0 %v206
  %664 = vmatprep.subr.bf16.mxu0 0
  %665 = vmatpush1.bf16.msra.mxu0 %v207
  %666 = vmatprep.subr.bf16.mxu0 0
  %667 = vmatpush1.bf16.msra.mxu0 %v208
  %668 = vmatprep.subr.bf16.mxu0 0
  %669 = vmatpush1.bf16.msra.mxu0 %v209
  %670 = vmatprep.subr.bf16.mxu0 0
  %671 = vmatpush1.bf16.msra.mxu0 0
  %672 = vmatprep.subr.bf16.mxu0 0
  %673 = vmatpush1.bf16.msra.mxu0 0
  %674 = vmatprep.subr.bf16.mxu0 0
  %675 = vmatpush1.bf16.msra.mxu0 0
  %676 = vmatprep.subr.bf16.mxu0 0
  %677 = vmatpush1.bf16.msra.mxu0 0
  %678 = vmatprep.subr.bf16.mxu0 0
  %679 = vmatpush1.bf16.msra.mxu0 0
  %680 = vmatprep.subr.bf16.mxu0 0
  %681 = vmatpush1.bf16.msra.mxu0 0
  %682 = vmatprep.subr.bf16.mxu0 0
  %683 = vmatpush1.bf16.msra.mxu0 0
  %684 = vmatprep.subr.bf16.mxu0 0
  %685 = vmatpush1.bf16.msra.mxu0 0
  %686 = vmatprep.subr.bf16.mxu0 0
  %687 = vmatpush1.bf16.msra.mxu0 0
  %688 = vmatprep.subr.bf16.mxu0 0
  %689 = vmatpush1.bf16.msra.mxu0 0
  %690 = vmatprep.subr.bf16.mxu0 0
  %691 = vmatpush1.bf16.msra.mxu0 0
  %692 = vmatprep.subr.bf16.mxu0 0
  %693 = vmatpush1.bf16.msra.mxu0 0
  %694 = vmatprep.mubr.bf16.mxu0 0
  %695 = vmatmul.mubr.bf16.gmra.mrb[0].mxu0 %v660
  %v696 = vpop.f32.mrb[0].mxu0
  %v697 = vadd.f32 0.0, %v696
  %v698 = vpop.f32.mrb[0].mxu0
  %v699 = vpop.f32.mrb[0].mxu0
  %v700 = vpop.f32.mrb[0].mxu0
  %701 = vdwg.mxu0
  %v702 = vadd.f32 %v149, %v697
  %v703 = vxor.u32 %v702, 2147483648
  %v704 = vmul.f32 %v703, 1.442695
  %v705 = vpow.pop %v704
  %v706 = vadd.f32 %v705, 1.0
  %v707 = vrcp.pop %v706
  %v708 = vmul.f32 1.0, %v707
  %709 = vmatprep.subr.bf16.mxu0 0
  %710 = vmatpush1.bf16.msra.mxu0 %v281
  %711 = vmatprep.subr.bf16.mxu0 0
  %712 = vmatpush1.bf16.msra.mxu0 %v282
  %713 = vmatprep.subr.bf16.mxu0 0
  %714 = vmatpush1.bf16.msra.mxu0 %v283
  %715 = vmatprep.subr.bf16.mxu0 0
  %716 = vmatpush1.bf16.msra.mxu0 %v284
  %717 = vmatprep.subr.bf16.mxu0 0
  %718 = vmatpush1.bf16.msra.mxu0 0
  %719 = vmatprep.subr.bf16.mxu0 0
  %720 = vmatpush1.bf16.msra.mxu0 0
  %721 = vmatprep.subr.bf16.mxu0 0
  %722 = vmatpush1.bf16.msra.mxu0 0
  %723 = vmatprep.subr.bf16.mxu0 0
  %724 = vmatpush1.bf16.msra.mxu0 0
  %725 = vmatprep.subr.bf16.mxu0 0
  %726 = vmatpush1.bf16.msra.mxu0 0
  %727 = vmatprep.subr.bf16.mxu0 0
  %728 = vmatpush1.bf16.msra.mxu0 0
  %729 = vmatprep.subr.bf16.mxu0 0
  %730 = vmatpush1.bf16.msra.mxu0 0
  %731 = vmatprep.subr.bf16.mxu0 0
  %732 = vmatpush1.bf16.msra.mxu0 0
  %733 = vmatprep.subr.bf16.mxu0 0
  %734 = vmatpush1.bf16.msra.mxu0 0
  %735 = vmatprep.subr.bf16.mxu0 0
  %736 = vmatpush1.bf16.msra.mxu0 0
  %737 = vmatprep.subr.bf16.mxu0 0
  %738 = vmatpush1.bf16.msra.mxu0 0
  %739 = vmatprep.subr.bf16.mxu0 0
  %740 = vmatpush1.bf16.msra.mxu0 0
  %741 = vmatprep.mubr.bf16.mxu0 0
  %742 = vmatmul.mubr.bf16.gmra.mrb[0].mxu0 %v660
  %v743 = vpop.f32.mrb[0].mxu0
  %v744 = vadd.f32 %v172, %v743
  %v745 = vpop.f32.mrb[0].mxu0
  %v746 = vpop.f32.mrb[0].mxu0
  %v747 = vpop.f32.mrb[0].mxu0
  %748 = vdwg.mxu0
  %v749 = vmul.f32 %v708, %v744
  %v750 = vadd.f32 %v151, %v749
  %v751 = vtanh.pop %v750
  %v752 = vsub.f32 1.0, %v708
  %754 = vrot.lane.b32.xlu0 %v751, 64
  %v755 = vpop.permute.xlu0 %754
  %v757 = vmul.f32 %v752, %v755
  %v758 = vmul.f32 %v708, %v654
  %v759 = vadd.f32 %v757, %v758
  %v760 = vpack.c.bf16 %v759, %v759
  %762 = vrot.lane.b32.xlu0 %v760, 64
  %v763 = vpop.permute.xlu0 %762
  %v765 = vsel %vm214, %v763, 0
  %767 = vmatprep.subr.bf16.mxu0 0
  %768 = vmatpush1.bf16.msra.mxu0 %v206
  %769 = vmatprep.subr.bf16.mxu0 0
  %770 = vmatpush1.bf16.msra.mxu0 %v207
  %771 = vmatprep.subr.bf16.mxu0 0
  %772 = vmatpush1.bf16.msra.mxu0 %v208
  %773 = vmatprep.subr.bf16.mxu0 0
  %774 = vmatpush1.bf16.msra.mxu0 %v209
  %775 = vmatprep.subr.bf16.mxu0 0
  %776 = vmatpush1.bf16.msra.mxu0 0
  %777 = vmatprep.subr.bf16.mxu0 0
  %778 = vmatpush1.bf16.msra.mxu0 0
  %779 = vmatprep.subr.bf16.mxu0 0
  %780 = vmatpush1.bf16.msra.mxu0 0
  %781 = vmatprep.subr.bf16.mxu0 0
  %782 = vmatpush1.bf16.msra.mxu0 0
  %783 = vmatprep.subr.bf16.mxu0 0
  %784 = vmatpush1.bf16.msra.mxu0 0
  %785 = vmatprep.subr.bf16.mxu0 0
  %786 = vmatpush1.bf16.msra.mxu0 0
  %787 = vmatprep.subr.bf16.mxu0 0
  %788 = vmatpush1.bf16.msra.mxu0 0
  %789 = vmatprep.subr.bf16.mxu0 0
  %790 = vmatpush1.bf16.msra.mxu0 0
  %791 = vmatprep.subr.bf16.mxu0 0
  %792 = vmatpush1.bf16.msra.mxu0 0
  %793 = vmatprep.subr.bf16.mxu0 0
  %794 = vmatpush1.bf16.msra.mxu0 0
  %795 = vmatprep.subr.bf16.mxu0 0
  %796 = vmatpush1.bf16.msra.mxu0 0
  %797 = vmatprep.subr.bf16.mxu0 0
  %798 = vmatpush1.bf16.msra.mxu0 0
  %799 = vmatprep.mubr.bf16.mxu0 0
  %800 = vmatmul.mubr.bf16.gmra.mrb[0].mxu0 %v765
  %v801 = vpop.f32.mrb[0].mxu0
  %v802 = vadd.f32 0.0, %v801
  %v803 = vpop.f32.mrb[0].mxu0
  %v804 = vpop.f32.mrb[0].mxu0
  %v805 = vpop.f32.mrb[0].mxu0
  %806 = vdwg.mxu0
  %v807 = vadd.f32 %v153, %v802
  %v808 = vxor.u32 %v807, 2147483648
  %v809 = vmul.f32 %v808, 1.442695
  %v810 = vpow.pop %v809
  %v811 = vadd.f32 %v810, 1.0
  %v812 = vrcp.pop %v811
  %v813 = vmul.f32 1.0, %v812
  %814 = vmatprep.subr.bf16.mxu0 0
  %815 = vmatpush1.bf16.msra.mxu0 %v281
  %816 = vmatprep.subr.bf16.mxu0 0
  %817 = vmatpush1.bf16.msra.mxu0 %v282
  %818 = vmatprep.subr.bf16.mxu0 0
  %819 = vmatpush1.bf16.msra.mxu0 %v283
  %820 = vmatprep.subr.bf16.mxu0 0
  %821 = vmatpush1.bf16.msra.mxu0 %v284
  %822 = vmatprep.subr.bf16.mxu0 0
  %823 = vmatpush1.bf16.msra.mxu0 0
  %824 = vmatprep.subr.bf16.mxu0 0
  %825 = vmatpush1.bf16.msra.mxu0 0
  %826 = vmatprep.subr.bf16.mxu0 0
  %827 = vmatpush1.bf16.msra.mxu0 0
  %828 = vmatprep.subr.bf16.mxu0 0
  %829 = vmatpush1.bf16.msra.mxu0 0
  %830 = vmatprep.subr.bf16.mxu0 0
  %831 = vmatpush1.bf16.msra.mxu0 0
  %832 = vmatprep.subr.bf16.mxu0 0
  %833 = vmatpush1.bf16.msra.mxu0 0
  %834 = vmatprep.subr.bf16.mxu0 0
  %835 = vmatpush1.bf16.msra.mxu0 0
  %836 = vmatprep.subr.bf16.mxu0 0
  %837 = vmatpush1.bf16.msra.mxu0 0
  %838 = vmatprep.subr.bf16.mxu0 0
  %839 = vmatpush1.bf16.msra.mxu0 0
  %840 = vmatprep.subr.bf16.mxu0 0
  %841 = vmatpush1.bf16.msra.mxu0 0
  %842 = vmatprep.subr.bf16.mxu0 0
  %843 = vmatpush1.bf16.msra.mxu0 0
  %844 = vmatprep.subr.bf16.mxu0 0
  %845 = vmatpush1.bf16.msra.mxu0 0
  %846 = vmatprep.mubr.bf16.mxu0 0
  %847 = vmatmul.mubr.bf16.gmra.mrb[0].mxu0 %v765
  %v848 = vpop.f32.mrb[0].mxu0
  %v849 = vadd.f32 %v172, %v848
  %v850 = vpop.f32.mrb[0].mxu0
  %v851 = vpop.f32.mrb[0].mxu0
  %v852 = vpop.f32.mrb[0].mxu0
  %853 = vdwg.mxu0
  %v854 = vmul.f32 %v813, %v849
  %v855 = vadd.f32 %v155, %v854
  %v856 = vtanh.pop %v855
  %v857 = vsub.f32 1.0, %v813
  %859 = vrot.lane.b32.xlu0 %v856, 64
  %v860 = vpop.permute.xlu0 %859
  %v862 = vmul.f32 %v857, %v860
  %v863 = vmul.f32 %v813, %v759
  %v864 = vadd.f32 %v862, %v863
  %v865 = vpack.c.bf16 %v864, %v864
  %867 = vrot.lane.b32.xlu0 %v865, 64
  %v868 = vpop.permute.xlu0 %867
  %v870 = vsel %vm214, %v868, 0
  %872 = vmatprep.subr.bf16.mxu0 0
  %873 = vmatpush1.bf16.msra.mxu0 %v206
  %874 = vmatprep.subr.bf16.mxu0 0
  %875 = vmatpush1.bf16.msra.mxu0 %v207
  %876 = vmatprep.subr.bf16.mxu0 0
  %877 = vmatpush1.bf16.msra.mxu0 %v208
  %878 = vmatprep.subr.bf16.mxu0 0
  %879 = vmatpush1.bf16.msra.mxu0 %v209
  %880 = vmatprep.subr.bf16.mxu0 0
  %881 = vmatpush1.bf16.msra.mxu0 0
  %882 = vmatprep.subr.bf16.mxu0 0
  %883 = vmatpush1.bf16.msra.mxu0 0
  %884 = vmatprep.subr.bf16.mxu0 0
  %885 = vmatpush1.bf16.msra.mxu0 0
  %886 = vmatprep.subr.bf16.mxu0 0
  %887 = vmatpush1.bf16.msra.mxu0 0
  %888 = vmatprep.subr.bf16.mxu0 0
  %889 = vmatpush1.bf16.msra.mxu0 0
  %890 = vmatprep.subr.bf16.mxu0 0
  %891 = vmatpush1.bf16.msra.mxu0 0
  %892 = vmatprep.subr.bf16.mxu0 0
  %893 = vmatpush1.bf16.msra.mxu0 0
  %894 = vmatprep.subr.bf16.mxu0 0
  %895 = vmatpush1.bf16.msra.mxu0 0
  %896 = vmatprep.subr.bf16.mxu0 0
  %897 = vmatpush1.bf16.msra.mxu0 0
  %898 = vmatprep.subr.bf16.mxu0 0
  %899 = vmatpush1.bf16.msra.mxu0 0
  %900 = vmatprep.subr.bf16.mxu0 0
  %901 = vmatpush1.bf16.msra.mxu0 0
  %902 = vmatprep.subr.bf16.mxu0 0
  %903 = vmatpush1.bf16.msra.mxu0 0
  %904 = vmatprep.mubr.bf16.mxu0 0
  %905 = vmatmul.mubr.bf16.gmra.mrb[0].mxu0 %v870
  %v906 = vpop.f32.mrb[0].mxu0
  %v907 = vadd.f32 0.0, %v906
  %v908 = vpop.f32.mrb[0].mxu0
  %v909 = vpop.f32.mrb[0].mxu0
  %v910 = vpop.f32.mrb[0].mxu0
  %911 = vdwg.mxu0
  %v912 = vadd.f32 %v159, %v907
  %v913 = vxor.u32 %v912, 2147483648
  %v914 = vmul.f32 %v913, 1.442695
  %v915 = vpow.pop %v914
  %v916 = vadd.f32 %v915, 1.0
  %v917 = vrcp.pop %v916
  %v918 = vmul.f32 1.0, %v917
  %919 = vmatprep.subr.bf16.mxu0 0
  %920 = vmatpush1.bf16.msra.mxu0 %v281
  %921 = vmatprep.subr.bf16.mxu0 0
  %922 = vmatpush1.bf16.msra.mxu0 %v282
  %923 = vmatprep.subr.bf16.mxu0 0
  %924 = vmatpush1.bf16.msra.mxu0 %v283
  %925 = vmatprep.subr.bf16.mxu0 0
  %926 = vmatpush1.bf16.msra.mxu0 %v284
  %927 = vmatprep.subr.bf16.mxu0 0
  %928 = vmatpush1.bf16.msra.mxu0 0
  %929 = vmatprep.subr.bf16.mxu0 0
  %930 = vmatpush1.bf16.msra.mxu0 0
  %931 = vmatprep.subr.bf16.mxu0 0
  %932 = vmatpush1.bf16.msra.mxu0 0
  %933 = vmatprep.subr.bf16.mxu0 0
  %934 = vmatpush1.bf16.msra.mxu0 0
  %935 = vmatprep.subr.bf16.mxu0 0
  %936 = vmatpush1.bf16.msra.mxu0 0
  %937 = vmatprep.subr.bf16.mxu0 0
  %938 = vmatpush1.bf16.msra.mxu0 0
  %939 = vmatprep.subr.bf16.mxu0 0
  %940 = vmatpush1.bf16.msra.mxu0 0
  %941 = vmatprep.subr.bf16.mxu0 0
  %942 = vmatpush1.bf16.msra.mxu0 0
  %943 = vmatprep.subr.bf16.mxu0 0
  %944 = vmatpush1.bf16.msra.mxu0 0
  %945 = vmatprep.subr.bf16.mxu0 0
  %946 = vmatpush1.bf16.msra.mxu0 0
  %947 = vmatprep.subr.bf16.mxu0 0
  %948 = vmatpush1.bf16.msra.mxu0 0
  %949 = vmatprep.subr.bf16.mxu0 0
  %950 = vmatpush1.bf16.msra.mxu0 0
  %951 = vmatprep.mubr.bf16.mxu0 0
  %952 = vmatmul.mubr.bf16.gmra.mrb[0].mxu0 %v870
  %v953 = vpop.f32.mrb[0].mxu0
  %v954 = vadd.f32 %v172, %v953
  %v955 = vpop.f32.mrb[0].mxu0
  %v956 = vpop.f32.mrb[0].mxu0
  %v957 = vpop.f32.mrb[0].mxu0
  %958 = vdwg.mxu0
  %v959 = vmul.f32 %v918, %v954
  %v960 = vadd.f32 %v161, %v959
  %v961 = vtanh.pop %v960
  %v962 = vsub.f32 1.0, %v918
  %964 = vrot.lane.b32.xlu0 %v961, 64
  %v965 = vpop.permute.xlu0 %964
  %v967 = vmul.f32 %v962, %v965
  %v968 = vmul.f32 %v918, %v864
  %v969 = vadd.f32 %v967, %v968
  %v970 = vpack.c.bf16 %v969, %v969
  %972 = vrot.lane.b32.xlu0 %v970, 64
  %v973 = vpop.permute.xlu0 %972
  %v975 = vsel %vm214, %v973, 0
  %977 = vmatprep.subr.bf16.mxu0 0
  %978 = vmatpush1.bf16.msra.mxu0 %v206
  %979 = vmatprep.subr.bf16.mxu0 0
  %980 = vmatpush1.bf16.msra.mxu0 %v207
  %981 = vmatprep.subr.bf16.mxu0 0
  %982 = vmatpush1.bf16.msra.mxu0 %v208
  %983 = vmatprep.subr.bf16.mxu0 0
  %984 = vmatpush1.bf16.msra.mxu0 %v209
  %985 = vmatprep.subr.bf16.mxu0 0
  %986 = vmatpush1.bf16.msra.mxu0 0
  %987 = vmatprep.subr.bf16.mxu0 0
  %988 = vmatpush1.bf16.msra.mxu0 0
  %989 = vmatprep.subr.bf16.mxu0 0
  %990 = vmatpush1.bf16.msra.mxu0 0
  %991 = vmatprep.subr.bf16.mxu0 0
  %992 = vmatpush1.bf16.msra.mxu0 0
  %993 = vmatprep.subr.bf16.mxu0 0
  %994 = vmatpush1.bf16.msra.mxu0 0
  %995 = vmatprep.subr.bf16.mxu0 0
  %996 = vmatpush1.bf16.msra.mxu0 0
  %997 = vmatprep.subr.bf16.mxu0 0
  %998 = vmatpush1.bf16.msra.mxu0 0
  %999 = vmatprep.subr.bf16.mxu0 0
  %1000 = vmatpush1.bf16.msra.mxu0 0
  %1001 = vmatprep.subr.bf16.mxu0 0
  %1002 = vmatpush1.bf16.msra.mxu0 0
  %1003 = vmatprep.subr.bf16.mxu0 0
  %1004 = vmatpush1.bf16.msra.mxu0 0
  %1005 = vmatprep.subr.bf16.mxu0 0
  %1006 = vmatpush1.bf16.msra.mxu0 0
  %1007 = vmatprep.subr.bf16.mxu0 0
  %1008 = vmatpush1.bf16.msra.mxu0 0
  %1009 = vmatprep.mubr.bf16.mxu0 0
  %1010 = vmatmul.mubr.bf16.gmra.mrb[0].mxu0 %v975
  %v1011 = vpop.f32.mrb[0].mxu0
  %v1012 = vadd.f32 0.0, %v1011
  %v1013 = vpop.f32.mrb[0].mxu0
  %v1014 = vpop.f32.mrb[0].mxu0
  %v1015 = vpop.f32.mrb[0].mxu0
  %1016 = vdwg.mxu0
  %v1017 = vadd.f32 %v163, %v1012
  %v1018 = vxor.u32 %v1017, 2147483648
  %v1019 = vmul.f32 %v1018, 1.442695
  %v1020 = vpow.pop %v1019
  %v1021 = vadd.f32 %v1020, 1.0
  %v1022 = vrcp.pop %v1021
  %v1023 = vmul.f32 1.0, %v1022
  %1024 = vmatprep.subr.bf16.mxu0 0
  %1025 = vmatpush1.bf16.msra.mxu0 %v281
  %1026 = vmatprep.subr.bf16.mxu0 0
  %1027 = vmatpush1.bf16.msra.mxu0 %v282
  %1028 = vmatprep.subr.bf16.mxu0 0
  %1029 = vmatpush1.bf16.msra.mxu0 %v283
  %1030 = vmatprep.subr.bf16.mxu0 0
  %1031 = vmatpush1.bf16.msra.mxu0 %v284
  %1032 = vmatprep.subr.bf16.mxu0 0
  %1033 = vmatpush1.bf16.msra.mxu0 0
  %1034 = vmatprep.subr.bf16.mxu0 0
  %1035 = vmatpush1.bf16.msra.mxu0 0
  %1036 = vmatprep.subr.bf16.mxu0 0
  %1037 = vmatpush1.bf16.msra.mxu0 0
  %1038 = vmatprep.subr.bf16.mxu0 0
  %1039 = vmatpush1.bf16.msra.mxu0 0
  %1040 = vmatprep.subr.bf16.mxu0 0
  %1041 = vmatpush1.bf16.msra.mxu0 0
  %1042 = vmatprep.subr.bf16.mxu0 0
  %1043 = vmatpush1.bf16.msra.mxu0 0
  %1044 = vmatprep.subr.bf16.mxu0 0
  %1045 = vmatpush1.bf16.msra.mxu0 0
  %1046 = vmatprep.subr.bf16.mxu0 0
  %1047 = vmatpush1.bf16.msra.mxu0 0
  %1048 = vmatprep.subr.bf16.mxu0 0
  %1049 = vmatpush1.bf16.msra.mxu0 0
  %1050 = vmatprep.subr.bf16.mxu0 0
  %1051 = vmatpush1.bf16.msra.mxu0 0
  %1052 = vmatprep.subr.bf16.mxu0 0
  %1053 = vmatpush1.bf16.msra.mxu0 0
  %1054 = vmatprep.subr.bf16.mxu0 0
  %1055 = vmatpush1.bf16.msra.mxu0 0
  %1056 = vmatprep.mubr.bf16.mxu0 0
  %1057 = vmatmul.mubr.bf16.gmra.mrb[0].mxu0 %v975
  %v1058 = vpop.f32.mrb[0].mxu0
  %v1059 = vadd.f32 %v172, %v1058
  %v1060 = vpop.f32.mrb[0].mxu0
  %v1061 = vpop.f32.mrb[0].mxu0
  %v1062 = vpop.f32.mrb[0].mxu0
  %1063 = vdwg.mxu0
  %v1064 = vmul.f32 %v1023, %v1059
  %v1065 = vadd.f32 %v165, %v1064
  %v1066 = vtanh.pop %v1065
  %v1067 = vsub.f32 1.0, %v1023
  %1069 = vrot.lane.b32.xlu0 %v1066, 64
  %v1070 = vpop.permute.xlu0 %1069
  %v1072 = vmul.f32 %v1067, %v1070
  %v1073 = vmul.f32 %v1023, %v969
  %v1074 = vadd.f32 %v1072, %v1073
  %v1075 = vpack.c.bf16 %v444, %v339
  %v1076 = vpack.c.bf16 %v654, %v549
  %v1077 = vpack.c.bf16 %v864, %v759
  %v1078 = vpack.c.bf16 %v1074, %v969
  %v1079 = vld [vmem:[%s6] sm:$0xff]
  %v1080 = vld [vmem:[%s6 + $0x8] sm:$0xff]
  %v1081 = vld [vmem:[%s6 + $0x10] sm:$0xff]
  %v1082 = vld [vmem:[%s6 + $0x18] sm:$0xff]
  %v1083 = vld [vmem:[%s6 + $0x20] sm:$0xff]
  %v1084 = vld [vmem:[%s6 + $0x28] sm:$0xff]
  %v1085 = vld [vmem:[%s6 + $0x30] sm:$0xff]
  %v1086 = vld [vmem:[%s6 + $0x38] sm:$0xff]
  %v1087 = vld [vmem:[%s9] sm:$0x3]
  %v1089 = vlaneseq
  %v1090 = vshrl.u32 %v1089, 7
  %v1091 = vsub.s32 0, %v1090
  %v1092 = vrot.slane %v1087, %v1091
  %v1093 = vlaneseq
  %v1094 = vshrl.u32 %v1093, 7
  %v1095 = vsub.s32 1, %v1094
  %v1096 = vrot.slane %v1087, %v1095
  %1103 = vrot.lane.b32.xlu0 %v1075, 64
  %v1104 = vpop.permute.xlu0 %1103
  %1105 = vrot.lane.b32.xlu0 %v1076, 64
  %v1106 = vpop.permute.xlu0 %1105
  %1107 = vrot.lane.b32.xlu0 %v1077, 64
  %v1108 = vpop.permute.xlu0 %1107
  %1109 = vrot.lane.b32.xlu0 %v1078, 64
  %v1110 = vpop.permute.xlu0 %1109
  %v1119 = vunpack.c.l.b16 %v1079
  %v1120 = vunpack.c.h.b16 %v1079
  %v1121 = vunpack.c.l.b16 %v1080
  %v1122 = vunpack.c.h.b16 %v1080
  %v1123 = vunpack.c.l.b16 %v1081
  %v1124 = vunpack.c.h.b16 %v1081
  %v1125 = vunpack.c.l.b16 %v1082
  %v1126 = vunpack.c.h.b16 %v1082
  %v1127 = vunpack.c.l.b16 %v1083
  %v1128 = vunpack.c.h.b16 %v1083
  %v1129 = vunpack.c.l.b16 %v1084
  %v1130 = vunpack.c.h.b16 %v1084
  %v1131 = vunpack.c.l.b16 %v1085
  %v1132 = vunpack.c.h.b16 %v1085
  %v1133 = vunpack.c.l.b16 %v1086
  %v1134 = vunpack.c.h.b16 %v1086
  %v1135 = vpack.c.b16 %v1121, %v1119
  %v1136 = vpack.c.b16 %v1122, %v1120
  %v1137 = vpack.c.b16 %v1125, %v1123
  %v1138 = vpack.c.b16 %v1126, %v1124
  %v1139 = vpack.c.b16 %v1129, %v1127
  %v1140 = vpack.c.b16 %v1130, %v1128
  %v1141 = vpack.c.b16 %v1133, %v1131
  %v1142 = vpack.c.b16 %v1134, %v1132
  %v1152 = vsel %vm214, %v1104, 0
  %v1155 = vsel %vm214, %v1106, 0
  %v1158 = vsel %vm214, %v1108, 0
  %v1161 = vsel %vm214, %v1110, 0
  %1163 = vmatprep.subr.bf16.mxu0 %v1136
  %1164 = vmatpush1.bf16.msra.mxu0 %v1135
  %1165 = vmatprep.subr.bf16.mxu0 %v1138
  %1166 = vmatpush1.bf16.msra.mxu0 %v1137
  %1167 = vmatprep.subr.bf16.mxu0 %v1140
  %1168 = vmatpush1.bf16.msra.mxu0 %v1139
  %1169 = vmatprep.subr.bf16.mxu0 %v1142
  %1170 = vmatpush1.bf16.msra.mxu0 %v1141
  %1171 = vmatprep.subr.bf16.mxu0 0
  %1172 = vmatpush1.bf16.msra.mxu0 0
  %1173 = vmatprep.subr.bf16.mxu0 0
  %1174 = vmatpush1.bf16.msra.mxu0 0
  %1175 = vmatprep.subr.bf16.mxu0 0
  %1176 = vmatpush1.bf16.msra.mxu0 0
  %1177 = vmatprep.subr.bf16.mxu0 0
  %1178 = vmatpush1.bf16.msra.mxu0 0
  %1179 = vmatprep.subr.bf16.mxu0 0
  %1180 = vmatpush1.bf16.msra.mxu0 0
  %1181 = vmatprep.subr.bf16.mxu0 0
  %1182 = vmatpush1.bf16.msra.mxu0 0
  %1183 = vmatprep.subr.bf16.mxu0 0
  %1184 = vmatpush1.bf16.msra.mxu0 0
  %1185 = vmatprep.subr.bf16.mxu0 0
  %1186 = vmatpush1.bf16.msra.mxu0 0
  %1187 = vmatprep.subr.bf16.mxu0 0
  %1188 = vmatpush1.bf16.msra.mxu0 0
  %1189 = vmatprep.subr.bf16.mxu0 0
  %1190 = vmatpush1.bf16.msra.mxu0 0
  %1191 = vmatprep.subr.bf16.mxu0 0
  %1192 = vmatpush1.bf16.msra.mxu0 0
  %1193 = vmatprep.subr.bf16.mxu0 0
  %1194 = vmatpush1.bf16.msra.mxu0 0
  %1195 = vmatprep.mubr.bf16.mxu0 0
  %1196 = vmatmul.mubr.bf16.gmra.mrb[0].mxu0 %v1152
  %v1197 = vpop.f32.mrb[0].mxu0
  %v1198 = vadd.f32 %v1092, %v1197
  %v1199 = vpop.f32.mrb[0].mxu0
  %v1200 = vadd.f32 %v1096, %v1199
  %v1201 = vpop.f32.mrb[0].mxu0
  %v1202 = vadd.f32 %v1092, %v1201
  %v1203 = vpop.f32.mrb[0].mxu0
  %v1204 = vadd.f32 %v1096, %v1203
  %1205 = vmatprep.mubr.bf16.mxu0 0
  %1206 = vmatmul.mubr.bf16.gmra.mrb[0].mxu0 %v1155
  %v1207 = vpop.f32.mrb[0].mxu0
  %v1208 = vadd.f32 %v1092, %v1207
  %v1209 = vpop.f32.mrb[0].mxu0
  %v1210 = vadd.f32 %v1096, %v1209
  %v1211 = vpop.f32.mrb[0].mxu0
  %v1212 = vadd.f32 %v1092, %v1211
  %v1213 = vpop.f32.mrb[0].mxu0
  %v1214 = vadd.f32 %v1096, %v1213
  %1215 = vmatprep.mubr.bf16.mxu0 0
  %1216 = vmatmul.mubr.bf16.gmra.mrb[0].mxu0 %v1158
  %v1217 = vpop.f32.mrb[0].mxu0
  %v1218 = vadd.f32 %v1092, %v1217
  %v1219 = vpop.f32.mrb[0].mxu0
  %v1220 = vadd.f32 %v1096, %v1219
  %v1221 = vpop.f32.mrb[0].mxu0
  %v1222 = vadd.f32 %v1092, %v1221
  %v1223 = vpop.f32.mrb[0].mxu0
  %v1224 = vadd.f32 %v1096, %v1223
  %1225 = vmatprep.mubr.bf16.mxu0 0
  %1226 = vmatmul.mubr.bf16.gmra.mrb[0].mxu0 %v1161
  %v1227 = vpop.f32.mrb[0].mxu0
  %v1228 = vadd.f32 %v1092, %v1227
  %v1229 = vpop.f32.mrb[0].mxu0
  %v1230 = vadd.f32 %v1096, %v1229
  %v1231 = vpop.f32.mrb[0].mxu0
  %v1232 = vadd.f32 %v1092, %v1231
  %v1233 = vpop.f32.mrb[0].mxu0
  %v1234 = vadd.f32 %v1096, %v1233
  %1235 = vdwg.mxu0
  %v1236 = vld [vmem:[%s10] sm:$0x1]
  %v1238 = vlaneseq
  %v1239 = vshrl.u32 %v1238, 7
  %v1240 = vsub.s32 0, %v1239
  %v1241 = vrot.slane %v1236, %v1240
  %v1243 = vld [vmem:[%s7] sm:$0xf]
  %v1244 = vld [vmem:[%s7 + $0x4] sm:$0xf]
  %v1245 = vld [vmem:[%s7 + $0x8] sm:$0xf]
  %v1246 = vld [vmem:[%s7 + $0xc] sm:$0xf]
  %v1247 = vld [vmem:[%s7 + $0x10] sm:$0xf]
  %v1248 = vld [vmem:[%s7 + $0x14] sm:$0xf]
  %v1249 = vld [vmem:[%s7 + $0x18] sm:$0xf]
  %v1250 = vld [vmem:[%s7 + $0x1c] sm:$0xf]
  %v1251 = vld [vmem:[%s8] sm:$0xf]
  %v1252 = vld [vmem:[%s8 + $0x4] sm:$0xf]
  %v1253 = vld [vmem:[%s8 + $0x8] sm:$0xf]
  %v1254 = vld [vmem:[%s8 + $0xc] sm:$0xf]
  %v1255 = vld [vmem:[%s8 + $0x10] sm:$0xf]
  %v1256 = vld [vmem:[%s8 + $0x14] sm:$0xf]
  %v1257 = vld [vmem:[%s8 + $0x18] sm:$0xf]
  %v1258 = vld [vmem:[%s8 + $0x1c] sm:$0xf]
  %v1267 = vunpack.c.l.b16 %v1243
  %v1268 = vunpack.c.l.b16 %v1244
  %v1269 = vunpack.c.l.b16 %v1245
  %v1270 = vunpack.c.l.b16 %v1246
  %v1271 = vunpack.c.l.b16 %v1247
  %v1272 = vunpack.c.l.b16 %v1248
  %v1273 = vunpack.c.l.b16 %v1249
  %v1274 = vunpack.c.l.b16 %v1250
  %v1275 = vpack.c.b16 %v1268, %v1267
  %v1276 = vpack.c.b16 %v1270, %v1269
  %v1277 = vpack.c.b16 %v1272, %v1271
  %v1278 = vpack.c.b16 %v1274, %v1273
  %1283 = vmatprep.subr.bf16.mxu0 0
  %1284 = vmatpush1.bf16.msra.mxu0 %v1275
  %1285 = vmatprep.subr.bf16.mxu0 0
  %1286 = vmatpush1.bf16.msra.mxu0 %v1276
  %1287 = vmatprep.subr.bf16.mxu0 0
  %1288 = vmatpush1.bf16.msra.mxu0 %v1277
  %1289 = vmatprep.subr.bf16.mxu0 0
  %1290 = vmatpush1.bf16.msra.mxu0 %v1278
  %1291 = vmatprep.subr.bf16.mxu0 0
  %1292 = vmatpush1.bf16.msra.mxu0 0
  %1293 = vmatprep.subr.bf16.mxu0 0
  %1294 = vmatpush1.bf16.msra.mxu0 0
  %1295 = vmatprep.subr.bf16.mxu0 0
  %1296 = vmatpush1.bf16.msra.mxu0 0
  %1297 = vmatprep.subr.bf16.mxu0 0
  %1298 = vmatpush1.bf16.msra.mxu0 0
  %1299 = vmatprep.subr.bf16.mxu0 0
  %1300 = vmatpush1.bf16.msra.mxu0 0
  %1301 = vmatprep.subr.bf16.mxu0 0
  %1302 = vmatpush1.bf16.msra.mxu0 0
  %1303 = vmatprep.subr.bf16.mxu0 0
  %1304 = vmatpush1.bf16.msra.mxu0 0
  %1305 = vmatprep.subr.bf16.mxu0 0
  %1306 = vmatpush1.bf16.msra.mxu0 0
  %1307 = vmatprep.subr.bf16.mxu0 0
  %1308 = vmatpush1.bf16.msra.mxu0 0
  %1309 = vmatprep.subr.bf16.mxu0 0
  %1310 = vmatpush1.bf16.msra.mxu0 0
  %1311 = vmatprep.subr.bf16.mxu0 0
  %1312 = vmatpush1.bf16.msra.mxu0 0
  %1313 = vmatprep.subr.bf16.mxu0 0
  %1314 = vmatpush1.bf16.msra.mxu0 0
  %1315 = vmatprep.mubr.bf16.mxu0 0
  %1316 = vmatmul.mubr.bf16.gmra.mrb[0].mxu0 %v216
  %v1317 = vpop.f32.mrb[0].mxu0
  %v1318 = vadd.f32 0.0, %v1317
  %v1319 = vpop.f32.mrb[0].mxu0
  %v1320 = vpop.f32.mrb[0].mxu0
  %v1321 = vpop.f32.mrb[0].mxu0
  %1322 = vdwg.mxu0
  %v1323 = vadd.f32 %v1198, %v1318
  %v1324 = vxor.u32 %v1323, 2147483648
  %v1325 = vmul.f32 %v1324, 1.442695
  %v1326 = vpow.pop %v1325
  %v1327 = vadd.f32 %v1326, 1.0
  %v1328 = vrcp.pop %v1327
  %v1329 = vmul.f32 1.0, %v1328
  %v1338 = vunpack.c.l.b16 %v1251
  %v1339 = vunpack.c.l.b16 %v1252
  %v1340 = vunpack.c.l.b16 %v1253
  %v1341 = vunpack.c.l.b16 %v1254
  %v1342 = vunpack.c.l.b16 %v1255
  %v1343 = vunpack.c.l.b16 %v1256
  %v1344 = vunpack.c.l.b16 %v1257
  %v1345 = vunpack.c.l.b16 %v1258
  %v1346 = vpack.c.b16 %v1339, %v1338
  %v1347 = vpack.c.b16 %v1341, %v1340
  %v1348 = vpack.c.b16 %v1343, %v1342
  %v1349 = vpack.c.b16 %v1345, %v1344
  %1354 = vmatprep.subr.bf16.mxu0 0
  %1355 = vmatpush1.bf16.msra.mxu0 %v1346
  %1356 = vmatprep.subr.bf16.mxu0 0
  %1357 = vmatpush1.bf16.msra.mxu0 %v1347
  %1358 = vmatprep.subr.bf16.mxu0 0
  %1359 = vmatpush1.bf16.msra.mxu0 %v1348
  %1360 = vmatprep.subr.bf16.mxu0 0
  %1361 = vmatpush1.bf16.msra.mxu0 %v1349
  %1362 = vmatprep.subr.bf16.mxu0 0
  %1363 = vmatpush1.bf16.msra.mxu0 0
  %1364 = vmatprep.subr.bf16.mxu0 0
  %1365 = vmatpush1.bf16.msra.mxu0 0
  %1366 = vmatprep.subr.bf16.mxu0 0
  %1367 = vmatpush1.bf16.msra.mxu0 0
  %1368 = vmatprep.subr.bf16.mxu0 0
  %1369 = vmatpush1.bf16.msra.mxu0 0
  %1370 = vmatprep.subr.bf16.mxu0 0
  %1371 = vmatpush1.bf16.msra.mxu0 0
  %1372 = vmatprep.subr.bf16.mxu0 0
  %1373 = vmatpush1.bf16.msra.mxu0 0
  %1374 = vmatprep.subr.bf16.mxu0 0
  %1375 = vmatpush1.bf16.msra.mxu0 0
  %1376 = vmatprep.subr.bf16.mxu0 0
  %1377 = vmatpush1.bf16.msra.mxu0 0
  %1378 = vmatprep.subr.bf16.mxu0 0
  %1379 = vmatpush1.bf16.msra.mxu0 0
  %1380 = vmatprep.subr.bf16.mxu0 0
  %1381 = vmatpush1.bf16.msra.mxu0 0
  %1382 = vmatprep.subr.bf16.mxu0 0
  %1383 = vmatpush1.bf16.msra.mxu0 0
  %1384 = vmatprep.subr.bf16.mxu0 0
  %1385 = vmatpush1.bf16.msra.mxu0 0
  %1386 = vmatprep.mubr.bf16.mxu0 0
  %1387 = vmatmul.mubr.bf16.gmra.mrb[0].mxu0 %v216
  %v1388 = vpop.f32.mrb[0].mxu0
  %v1389 = vadd.f32 %v1241, %v1388
  %v1390 = vpop.f32.mrb[0].mxu0
  %v1391 = vpop.f32.mrb[0].mxu0
  %v1392 = vpop.f32.mrb[0].mxu0
  %1393 = vdwg.mxu0
  %v1394 = vmul.f32 %v1329, %v1389
  %v1395 = vadd.f32 %v1200, %v1394
  %v1396 = vtanh.pop %v1395
  %v1397 = vsub.f32 1.0, %v1329
  %1399 = vrot.lane.b32.xlu0 %v1396, 64
  %v1400 = vpop.permute.xlu0 %1399
  %v1402 = vmul.f32 %v1397, %v1400
  %v1403 = vmul.f32 %v1329, 0.0
  %v1404 = vadd.f32 %v1402, %v1403
  %v1405 = vpack.c.bf16 %v1404, %v1404
  %1407 = vrot.lane.b32.xlu0 %v1405, 64
  %v1408 = vpop.permute.xlu0 %1407
  %v1410 = vsel %vm214, %v1408, 0
  %1412 = vmatprep.subr.bf16.mxu0 0
  %1413 = vmatpush1.bf16.msra.mxu0 %v1275
  %1414 = vmatprep.subr.bf16.mxu0 0
  %1415 = vmatpush1.bf16.msra.mxu0 %v1276
  %1416 = vmatprep.subr.bf16.mxu0 0
  %1417 = vmatpush1.bf16.msra.mxu0 %v1277
  %1418 = vmatprep.subr.bf16.mxu0 0
  %1419 = vmatpush1.bf16.msra.mxu0 %v1278
  %1420 = vmatprep.subr.bf16.mxu0 0
  %1421 = vmatpush1.bf16.msra.mxu0 0
  %1422 = vmatprep.subr.bf16.mxu0 0
  %1423 = vmatpush1.bf16.msra.mxu0 0
  %1424 = vmatprep.subr.bf16.mxu0 0
  %1425 = vmatpush1.bf16.msra.mxu0 0
  %1426 = vmatprep.subr.bf16.mxu0 0
  %1427 = vmatpush1.bf16.msra.mxu0 0
  %1428 = vmatprep.subr.bf16.mxu0 0
  %1429 = vmatpush1.bf16.msra.mxu0 0
  %1430 = vmatprep.subr.bf16.mxu0 0
  %1431 = vmatpush1.bf16.msra.mxu0 0
  %1432 = vmatprep.subr.bf16.mxu0 0
  %1433 = vmatpush1.bf16.msra.mxu0 0
  %1434 = vmatprep.subr.bf16.mxu0 0
  %1435 = vmatpush1.bf16.msra.mxu0 0
  %1436 = vmatprep.subr.bf16.mxu0 0
  %1437 = vmatpush1.bf16.msra.mxu0 0
  %1438 = vmatprep.subr.bf16.mxu0 0
  %1439 = vmatpush1.bf16.msra.mxu0 0
  %1440 = vmatprep.subr.bf16.mxu0 0
  %1441 = vmatpush1.bf16.msra.mxu0 0
  %1442 = vmatprep.subr.bf16.mxu0 0
  %1443 = vmatpush1.bf16.msra.mxu0 0
  %1444 = vmatprep.mubr.bf16.mxu0 0
  %1445 = vmatmul.mubr.bf16.gmra.mrb[0].mxu0 %v1410
  %v1446 = vpop.f32.mrb[0].mxu0
  %v1447 = vadd.f32 0.0, %v1446
  %v1448 = vpop.f32.mrb[0].mxu0
  %v1449 = vpop.f32.mrb[0].mxu0
  %v1450 = vpop.f32.mrb[0].mxu0
  %1451 = vdwg.mxu0
  %v1452 = vadd.f32 %v1202, %v1447
  %v1453 = vxor.u32 %v1452, 2147483648
  %v1454 = vmul.f32 %v1453, 1.442695
  %v1455 = vpow.pop %v1454
  %v1456 = vadd.f32 %v1455, 1.0
  %v1457 = vrcp.pop %v1456
  %v1458 = vmul.f32 1.0, %v1457
  %1459 = vmatprep.subr.bf16.mxu0 0
  %1460 = vmatpush1.bf16.msra.mxu0 %v1346
  %1461 = vmatprep.subr.bf16.mxu0 0
  %1462 = vmatpush1.bf16.msra.mxu0 %v1347
  %1463 = vmatprep.subr.bf16.mxu0 0
  %1464 = vmatpush1.bf16.msra.mxu0 %v1348
  %1465 = vmatprep.subr.bf16.mxu0 0
  %1466 = vmatpush1.bf16.msra.mxu0 %v1349
  %1467 = vmatprep.subr.bf16.mxu0 0
  %1468 = vmatpush1.bf16.msra.mxu0 0
  %1469 = vmatprep.subr.bf16.mxu0 0
  %1470 = vmatpush1.bf16.msra.mxu0 0
  %1471 = vmatprep.subr.bf16.mxu0 0
  %1472 = vmatpush1.bf16.msra.mxu0 0
  %1473 = vmatprep.subr.bf16.mxu0 0
  %1474 = vmatpush1.bf16.msra.mxu0 0
  %1475 = vmatprep.subr.bf16.mxu0 0
  %1476 = vmatpush1.bf16.msra.mxu0 0
  %1477 = vmatprep.subr.bf16.mxu0 0
  %1478 = vmatpush1.bf16.msra.mxu0 0
  %1479 = vmatprep.subr.bf16.mxu0 0
  %1480 = vmatpush1.bf16.msra.mxu0 0
  %1481 = vmatprep.subr.bf16.mxu0 0
  %1482 = vmatpush1.bf16.msra.mxu0 0
  %1483 = vmatprep.subr.bf16.mxu0 0
  %1484 = vmatpush1.bf16.msra.mxu0 0
  %1485 = vmatprep.subr.bf16.mxu0 0
  %1486 = vmatpush1.bf16.msra.mxu0 0
  %1487 = vmatprep.subr.bf16.mxu0 0
  %1488 = vmatpush1.bf16.msra.mxu0 0
  %1489 = vmatprep.subr.bf16.mxu0 0
  %1490 = vmatpush1.bf16.msra.mxu0 0
  %1491 = vmatprep.mubr.bf16.mxu0 0
  %1492 = vmatmul.mubr.bf16.gmra.mrb[0].mxu0 %v1410
  %v1493 = vpop.f32.mrb[0].mxu0
  %v1494 = vadd.f32 %v1241, %v1493
  %v1495 = vpop.f32.mrb[0].mxu0
  %v1496 = vpop.f32.mrb[0].mxu0
  %v1497 = vpop.f32.mrb[0].mxu0
  %1498 = vdwg.mxu0
  %v1499 = vmul.f32 %v1458, %v1494
  %v1500 = vadd.f32 %v1204, %v1499
  %v1501 = vtanh.pop %v1500
  %v1502 = vsub.f32 1.0, %v1458
  %1504 = vrot.lane.b32.xlu0 %v1501, 64
  %v1505 = vpop.permute.xlu0 %1504
  %v1507 = vmul.f32 %v1502, %v1505
  %v1508 = vmul.f32 %v1458, %v1404
  %v1509 = vadd.f32 %v1507, %v1508
  %v1510 = vpack.c.bf16 %v1509, %v1509
  %1512 = vrot.lane.b32.xlu0 %v1510, 64
  %v1513 = vpop.permute.xlu0 %1512
  %v1515 = vsel %vm214, %v1513, 0
  %1517 = vmatprep.subr.bf16.mxu0 0
  %1518 = vmatpush1.bf16.msra.mxu0 %v1275
  %1519 = vmatprep.subr.bf16.mxu0 0
  %1520 = vmatpush1.bf16.msra.mxu0 %v1276
  %1521 = vmatprep.subr.bf16.mxu0 0
  %1522 = vmatpush1.bf16.msra.mxu0 %v1277
  %1523 = vmatprep.subr.bf16.mxu0 0
  %1524 = vmatpush1.bf16.msra.mxu0 %v1278
  %1525 = vmatprep.subr.bf16.mxu0 0
  %1526 = vmatpush1.bf16.msra.mxu0 0
  %1527 = vmatprep.subr.bf16.mxu0 0
  %1528 = vmatpush1.bf16.msra.mxu0 0
  %1529 = vmatprep.subr.bf16.mxu0 0
  %1530 = vmatpush1.bf16.msra.mxu0 0
  %1531 = vmatprep.subr.bf16.mxu0 0
  %1532 = vmatpush1.bf16.msra.mxu0 0
  %1533 = vmatprep.subr.bf16.mxu0 0
  %1534 = vmatpush1.bf16.msra.mxu0 0
  %1535 = vmatprep.subr.bf16.mxu0 0
  %1536 = vmatpush1.bf16.msra.mxu0 0
  %1537 = vmatprep.subr.bf16.mxu0 0
  %1538 = vmatpush1.bf16.msra.mxu0 0
  %1539 = vmatprep.subr.bf16.mxu0 0
  %1540 = vmatpush1.bf16.msra.mxu0 0
  %1541 = vmatprep.subr.bf16.mxu0 0
  %1542 = vmatpush1.bf16.msra.mxu0 0
  %1543 = vmatprep.subr.bf16.mxu0 0
  %1544 = vmatpush1.bf16.msra.mxu0 0
  %1545 = vmatprep.subr.bf16.mxu0 0
  %1546 = vmatpush1.bf16.msra.mxu0 0
  %1547 = vmatprep.subr.bf16.mxu0 0
  %1548 = vmatpush1.bf16.msra.mxu0 0
  %1549 = vmatprep.mubr.bf16.mxu0 0
  %1550 = vmatmul.mubr.bf16.gmra.mrb[0].mxu0 %v1515
  %v1551 = vpop.f32.mrb[0].mxu0
  %v1552 = vadd.f32 0.0, %v1551
  %v1553 = vpop.f32.mrb[0].mxu0
  %v1554 = vpop.f32.mrb[0].mxu0
  %v1555 = vpop.f32.mrb[0].mxu0
  %1556 = vdwg.mxu0
  %v1557 = vadd.f32 %v1208, %v1552
  %v1558 = vxor.u32 %v1557, 2147483648
  %v1559 = vmul.f32 %v1558, 1.442695
  %v1560 = vpow.pop %v1559
  %v1561 = vadd.f32 %v1560, 1.0
  %v1562 = vrcp.pop %v1561
  %v1563 = vmul.f32 1.0, %v1562
  %1564 = vmatprep.subr.bf16.mxu0 0
  %1565 = vmatpush1.bf16.msra.mxu0 %v1346
  %1566 = vmatprep.subr.bf16.mxu0 0
  %1567 = vmatpush1.bf16.msra.mxu0 %v1347
  %1568 = vmatprep.subr.bf16.mxu0 0
  %1569 = vmatpush1.bf16.msra.mxu0 %v1348
  %1570 = vmatprep.subr.bf16.mxu0 0
  %1571 = vmatpush1.bf16.msra.mxu0 %v1349
  %1572 = vmatprep.subr.bf16.mxu0 0
  %1573 = vmatpush1.bf16.msra.mxu0 0
  %1574 = vmatprep.subr.bf16.mxu0 0
  %1575 = vmatpush1.bf16.msra.mxu0 0
  %1576 = vmatprep.subr.bf16.mxu0 0
  %1577 = vmatpush1.bf16.msra.mxu0 0
  %1578 = vmatprep.subr.bf16.mxu0 0
  %1579 = vmatpush1.bf16.msra.mxu0 0
  %1580 = vmatprep.subr.bf16.mxu0 0
  %1581 = vmatpush1.bf16.msra.mxu0 0
  %1582 = vmatprep.subr.bf16.mxu0 0
  %1583 = vmatpush1.bf16.msra.mxu0 0
  %1584 = vmatprep.subr.bf16.mxu0 0
  %1585 = vmatpush1.bf16.msra.mxu0 0
  %1586 = vmatprep.subr.bf16.mxu0 0
  %1587 = vmatpush1.bf16.msra.mxu0 0
  %1588 = vmatprep.subr.bf16.mxu0 0
  %1589 = vmatpush1.bf16.msra.mxu0 0
  %1590 = vmatprep.subr.bf16.mxu0 0
  %1591 = vmatpush1.bf16.msra.mxu0 0
  %1592 = vmatprep.subr.bf16.mxu0 0
  %1593 = vmatpush1.bf16.msra.mxu0 0
  %1594 = vmatprep.subr.bf16.mxu0 0
  %1595 = vmatpush1.bf16.msra.mxu0 0
  %1596 = vmatprep.mubr.bf16.mxu0 0
  %1597 = vmatmul.mubr.bf16.gmra.mrb[0].mxu0 %v1515
  %v1598 = vpop.f32.mrb[0].mxu0
  %v1599 = vadd.f32 %v1241, %v1598
  %v1600 = vpop.f32.mrb[0].mxu0
  %v1601 = vpop.f32.mrb[0].mxu0
  %v1602 = vpop.f32.mrb[0].mxu0
  %1603 = vdwg.mxu0
  %v1604 = vmul.f32 %v1563, %v1599
  %v1605 = vadd.f32 %v1210, %v1604
  %v1606 = vtanh.pop %v1605
  %v1607 = vsub.f32 1.0, %v1563
  %1609 = vrot.lane.b32.xlu0 %v1606, 64
  %v1610 = vpop.permute.xlu0 %1609
  %v1612 = vmul.f32 %v1607, %v1610
  %v1613 = vmul.f32 %v1563, %v1509
  %v1614 = vadd.f32 %v1612, %v1613
  %v1615 = vpack.c.bf16 %v1614, %v1614
  %1617 = vrot.lane.b32.xlu0 %v1615, 64
  %v1618 = vpop.permute.xlu0 %1617
  %v1620 = vsel %vm214, %v1618, 0
  %1622 = vmatprep.subr.bf16.mxu0 0
  %1623 = vmatpush1.bf16.msra.mxu0 %v1275
  %1624 = vmatprep.subr.bf16.mxu0 0
  %1625 = vmatpush1.bf16.msra.mxu0 %v1276
  %1626 = vmatprep.subr.bf16.mxu0 0
  %1627 = vmatpush1.bf16.msra.mxu0 %v1277
  %1628 = vmatprep.subr.bf16.mxu0 0
  %1629 = vmatpush1.bf16.msra.mxu0 %v1278
  %1630 = vmatprep.subr.bf16.mxu0 0
  %1631 = vmatpush1.bf16.msra.mxu0 0
  %1632 = vmatprep.subr.bf16.mxu0 0
  %1633 = vmatpush1.bf16.msra.mxu0 0
  %1634 = vmatprep.subr.bf16.mxu0 0
  %1635 = vmatpush1.bf16.msra.mxu0 0
  %1636 = vmatprep.subr.bf16.mxu0 0
  %1637 = vmatpush1.bf16.msra.mxu0 0
  %1638 = vmatprep.subr.bf16.mxu0 0
  %1639 = vmatpush1.bf16.msra.mxu0 0
  %1640 = vmatprep.subr.bf16.mxu0 0
  %1641 = vmatpush1.bf16.msra.mxu0 0
  %1642 = vmatprep.subr.bf16.mxu0 0
  %1643 = vmatpush1.bf16.msra.mxu0 0
  %1644 = vmatprep.subr.bf16.mxu0 0
  %1645 = vmatpush1.bf16.msra.mxu0 0
  %1646 = vmatprep.subr.bf16.mxu0 0
  %1647 = vmatpush1.bf16.msra.mxu0 0
  %1648 = vmatprep.subr.bf16.mxu0 0
  %1649 = vmatpush1.bf16.msra.mxu0 0
  %1650 = vmatprep.subr.bf16.mxu0 0
  %1651 = vmatpush1.bf16.msra.mxu0 0
  %1652 = vmatprep.subr.bf16.mxu0 0
  %1653 = vmatpush1.bf16.msra.mxu0 0
  %1654 = vmatprep.mubr.bf16.mxu0 0
  %1655 = vmatmul.mubr.bf16.gmra.mrb[0].mxu0 %v1620
  %v1656 = vpop.f32.mrb[0].mxu0
  %v1657 = vadd.f32 0.0, %v1656
  %v1658 = vpop.f32.mrb[0].mxu0
  %v1659 = vpop.f32.mrb[0].mxu0
  %v1660 = vpop.f32.mrb[0].mxu0
  %1661 = vdwg.mxu0
  %v1662 = vadd.f32 %v1212, %v1657
  %v1663 = vxor.u32 %v1662, 2147483648
  %v1664 = vmul.f32 %v1663, 1.442695
  %v1665 = vpow.pop %v1664
  %v1666 = vadd.f32 %v1665, 1.0
  %v1667 = vrcp.pop %v1666
  %v1668 = vmul.f32 1.0, %v1667
  %1669 = vmatprep.subr.bf16.mxu0 0
  %1670 = vmatpush1.bf16.msra.mxu0 %v1346
  %1671 = vmatprep.subr.bf16.mxu0 0
  %1672 = vmatpush1.bf16.msra.mxu0 %v1347
  %1673 = vmatprep.subr.bf16.mxu0 0
  %1674 = vmatpush1.bf16.msra.mxu0 %v1348
  %1675 = vmatprep.subr.bf16.mxu0 0
  %1676 = vmatpush1.bf16.msra.mxu0 %v1349
  %1677 = vmatprep.subr.bf16.mxu0 0
  %1678 = vmatpush1.bf16.msra.mxu0 0
  %1679 = vmatprep.subr.bf16.mxu0 0
  %1680 = vmatpush1.bf16.msra.mxu0 0
  %1681 = vmatprep.subr.bf16.mxu0 0
  %1682 = vmatpush1.bf16.msra.mxu0 0
  %1683 = vmatprep.subr.bf16.mxu0 0
  %1684 = vmatpush1.bf16.msra.mxu0 0
  %1685 = vmatprep.subr.bf16.mxu0 0
  %1686 = vmatpush1.bf16.msra.mxu0 0
  %1687 = vmatprep.subr.bf16.mxu0 0
  %1688 = vmatpush1.bf16.msra.mxu0 0
  %1689 = vmatprep.subr.bf16.mxu0 0
  %1690 = vmatpush1.bf16.msra.mxu0 0
  %1691 = vmatprep.subr.bf16.mxu0 0
  %1692 = vmatpush1.bf16.msra.mxu0 0
  %1693 = vmatprep.subr.bf16.mxu0 0
  %1694 = vmatpush1.bf16.msra.mxu0 0
  %1695 = vmatprep.subr.bf16.mxu0 0
  %1696 = vmatpush1.bf16.msra.mxu0 0
  %1697 = vmatprep.subr.bf16.mxu0 0
  %1698 = vmatpush1.bf16.msra.mxu0 0
  %1699 = vmatprep.subr.bf16.mxu0 0
  %1700 = vmatpush1.bf16.msra.mxu0 0
  %1701 = vmatprep.mubr.bf16.mxu0 0
  %1702 = vmatmul.mubr.bf16.gmra.mrb[0].mxu0 %v1620
  %v1703 = vpop.f32.mrb[0].mxu0
  %v1704 = vadd.f32 %v1241, %v1703
  %v1705 = vpop.f32.mrb[0].mxu0
  %v1706 = vpop.f32.mrb[0].mxu0
  %v1707 = vpop.f32.mrb[0].mxu0
  %1708 = vdwg.mxu0
  %v1709 = vmul.f32 %v1668, %v1704
  %v1710 = vadd.f32 %v1214, %v1709
  %v1711 = vtanh.pop %v1710
  %v1712 = vsub.f32 1.0, %v1668
  %1714 = vrot.lane.b32.xlu0 %v1711, 64
  %v1715 = vpop.permute.xlu0 %1714
  %v1717 = vmul.f32 %v1712, %v1715
  %v1718 = vmul.f32 %v1668, %v1614
  %v1719 = vadd.f32 %v1717, %v1718
  %v1720 = vpack.c.bf16 %v1719, %v1719
  %1722 = vrot.lane.b32.xlu0 %v1720, 64
  %v1723 = vpop.permute.xlu0 %1722
  %v1725 = vsel %vm214, %v1723, 0
  %1727 = vmatprep.subr.bf16.mxu0 0
  %1728 = vmatpush1.bf16.msra.mxu0 %v1275
  %1729 = vmatprep.subr.bf16.mxu0 0
  %1730 = vmatpush1.bf16.msra.mxu0 %v1276
  %1731 = vmatprep.subr.bf16.mxu0 0
  %1732 = vmatpush1.bf16.msra.mxu0 %v1277
  %1733 = vmatprep.subr.bf16.mxu0 0
  %1734 = vmatpush1.bf16.msra.mxu0 %v1278
  %1735 = vmatprep.subr.bf16.mxu0 0
  %1736 = vmatpush1.bf16.msra.mxu0 0
  %1737 = vmatprep.subr.bf16.mxu0 0
  %1738 = vmatpush1.bf16.msra.mxu0 0
  %1739 = vmatprep.subr.bf16.mxu0 0
  %1740 = vmatpush1.bf16.msra.mxu0 0
  %1741 = vmatprep.subr.bf16.mxu0 0
  %1742 = vmatpush1.bf16.msra.mxu0 0
  %1743 = vmatprep.subr.bf16.mxu0 0
  %1744 = vmatpush1.bf16.msra.mxu0 0
  %1745 = vmatprep.subr.bf16.mxu0 0
  %1746 = vmatpush1.bf16.msra.mxu0 0
  %1747 = vmatprep.subr.bf16.mxu0 0
  %1748 = vmatpush1.bf16.msra.mxu0 0
  %1749 = vmatprep.subr.bf16.mxu0 0
  %1750 = vmatpush1.bf16.msra.mxu0 0
  %1751 = vmatprep.subr.bf16.mxu0 0
  %1752 = vmatpush1.bf16.msra.mxu0 0
  %1753 = vmatprep.subr.bf16.mxu0 0
  %1754 = vmatpush1.bf16.msra.mxu0 0
  %1755 = vmatprep.subr.bf16.mxu0 0
  %1756 = vmatpush1.bf16.msra.mxu0 0
  %1757 = vmatprep.subr.bf16.mxu0 0
  %1758 = vmatpush1.bf16.msra.mxu0 0
  %1759 = vmatprep.mubr.bf16.mxu0 0
  %1760 = vmatmul.mubr.bf16.gmra.mrb[0].mxu0 %v1725
  %v1761 = vpop.f32.mrb[0].mxu0
  %v1762 = vadd.f32 0.0, %v1761
  %v1763 = vpop.f32.mrb[0].mxu0
  %v1764 = vpop.f32.mrb[0].mxu0
  %v1765 = vpop.f32.mrb[0].mxu0
  %1766 = vdwg.mxu0
  %v1767 = vadd.f32 %v1218, %v1762
  %v1768 = vxor.u32 %v1767, 2147483648
  %v1769 = vmul.f32 %v1768, 1.442695
  %v1770 = vpow.pop %v1769
  %v1771 = vadd.f32 %v1770, 1.0
  %v1772 = vrcp.pop %v1771
  %v1773 = vmul.f32 1.0, %v1772
  %1774 = vmatprep.subr.bf16.mxu0 0
  %1775 = vmatpush1.bf16.msra.mxu0 %v1346
  %1776 = vmatprep.subr.bf16.mxu0 0
  %1777 = vmatpush1.bf16.msra.mxu0 %v1347
  %1778 = vmatprep.subr.bf16.mxu0 0
  %1779 = vmatpush1.bf16.msra.mxu0 %v1348
  %1780 = vmatprep.subr.bf16.mxu0 0
  %1781 = vmatpush1.bf16.msra.mxu0 %v1349
  %1782 = vmatprep.subr.bf16.mxu0 0
  %1783 = vmatpush1.bf16.msra.mxu0 0
  %1784 = vmatprep.subr.bf16.mxu0 0
  %1785 = vmatpush1.bf16.msra.mxu0 0
  %1786 = vmatprep.subr.bf16.mxu0 0
  %1787 = vmatpush1.bf16.msra.mxu0 0
  %1788 = vmatprep.subr.bf16.mxu0 0
  %1789 = vmatpush1.bf16.msra.mxu0 0
  %1790 = vmatprep.subr.bf16.mxu0 0
  %1791 = vmatpush1.bf16.msra.mxu0 0
  %1792 = vmatprep.subr.bf16.mxu0 0
  %1793 = vmatpush1.bf16.msra.mxu0 0
  %1794 = vmatprep.subr.bf16.mxu0 0
  %1795 = vmatpush1.bf16.msra.mxu0 0
  %1796 = vmatprep.subr.bf16.mxu0 0
  %1797 = vmatpush1.bf16.msra.mxu0 0
  %1798 = vmatprep.subr.bf16.mxu0 0
  %1799 = vmatpush1.bf16.msra.mxu0 0
  %1800 = vmatprep.subr.bf16.mxu0 0
  %1801 = vmatpush1.bf16.msra.mxu0 0
  %1802 = vmatprep.subr.bf16.mxu0 0
  %1803 = vmatpush1.bf16.msra.mxu0 0
  %1804 = vmatprep.subr.bf16.mxu0 0
  %1805 = vmatpush1.bf16.msra.mxu0 0
  %1806 = vmatprep.mubr.bf16.mxu0 0
  %1807 = vmatmul.mubr.bf16.gmra.mrb[0].mxu0 %v1725
  %v1808 = vpop.f32.mrb[0].mxu0
  %v1809 = vadd.f32 %v1241, %v1808
  %v1810 = vpop.f32.mrb[0].mxu0
  %v1811 = vpop.f32.mrb[0].mxu0
  %v1812 = vpop.f32.mrb[0].mxu0
  %1813 = vdwg.mxu0
  %v1814 = vmul.f32 %v1773, %v1809
  %v1815 = vadd.f32 %v1220, %v1814
  %v1816 = vtanh.pop %v1815
  %v1817 = vsub.f32 1.0, %v1773
  %1819 = vrot.lane.b32.xlu0 %v1816, 64
  %v1820 = vpop.permute.xlu0 %1819
  %v1822 = vmul.f32 %v1817, %v1820
  %v1823 = vmul.f32 %v1773, %v1719
  %v1824 = vadd.f32 %v1822, %v1823
  %v1825 = vpack.c.bf16 %v1824, %v1824
  %1827 = vrot.lane.b32.xlu0 %v1825, 64
  %v1828 = vpop.permute.xlu0 %1827
  %v1830 = vsel %vm214, %v1828, 0
  %1832 = vmatprep.subr.bf16.mxu0 0
  %1833 = vmatpush1.bf16.msra.mxu0 %v1275
  %1834 = vmatprep.subr.bf16.mxu0 0
  %1835 = vmatpush1.bf16.msra.mxu0 %v1276
  %1836 = vmatprep.subr.bf16.mxu0 0
  %1837 = vmatpush1.bf16.msra.mxu0 %v1277
  %1838 = vmatprep.subr.bf16.mxu0 0
  %1839 = vmatpush1.bf16.msra.mxu0 %v1278
  %1840 = vmatprep.subr.bf16.mxu0 0
  %1841 = vmatpush1.bf16.msra.mxu0 0
  %1842 = vmatprep.subr.bf16.mxu0 0
  %1843 = vmatpush1.bf16.msra.mxu0 0
  %1844 = vmatprep.subr.bf16.mxu0 0
  %1845 = vmatpush1.bf16.msra.mxu0 0
  %1846 = vmatprep.subr.bf16.mxu0 0
  %1847 = vmatpush1.bf16.msra.mxu0 0
  %1848 = vmatprep.subr.bf16.mxu0 0
  %1849 = vmatpush1.bf16.msra.mxu0 0
  %1850 = vmatprep.subr.bf16.mxu0 0
  %1851 = vmatpush1.bf16.msra.mxu0 0
  %1852 = vmatprep.subr.bf16.mxu0 0
  %1853 = vmatpush1.bf16.msra.mxu0 0
  %1854 = vmatprep.subr.bf16.mxu0 0
  %1855 = vmatpush1.bf16.msra.mxu0 0
  %1856 = vmatprep.subr.bf16.mxu0 0
  %1857 = vmatpush1.bf16.msra.mxu0 0
  %1858 = vmatprep.subr.bf16.mxu0 0
  %1859 = vmatpush1.bf16.msra.mxu0 0
  %1860 = vmatprep.subr.bf16.mxu0 0
  %1861 = vmatpush1.bf16.msra.mxu0 0
  %1862 = vmatprep.subr.bf16.mxu0 0
  %1863 = vmatpush1.bf16.msra.mxu0 0
  %1864 = vmatprep.mubr.bf16.mxu0 0
  %1865 = vmatmul.mubr.bf16.gmra.mrb[0].mxu0 %v1830
  %v1866 = vpop.f32.mrb[0].mxu0
  %v1867 = vadd.f32 0.0, %v1866
  %v1868 = vpop.f32.mrb[0].mxu0
  %v1869 = vpop.f32.mrb[0].mxu0
  %v1870 = vpop.f32.mrb[0].mxu0
  %1871 = vdwg.mxu0
  %v1872 = vadd.f32 %v1222, %v1867
  %v1873 = vxor.u32 %v1872, 2147483648
  %v1874 = vmul.f32 %v1873, 1.442695
  %v1875 = vpow.pop %v1874
  %v1876 = vadd.f32 %v1875, 1.0
  %v1877 = vrcp.pop %v1876
  %v1878 = vmul.f32 1.0, %v1877
  %1879 = vmatprep.subr.bf16.mxu0 0
  %1880 = vmatpush1.bf16.msra.mxu0 %v1346
  %1881 = vmatprep.subr.bf16.mxu0 0
  %1882 = vmatpush1.bf16.msra.mxu0 %v1347
  %1883 = vmatprep.subr.bf16.mxu0 0
  %1884 = vmatpush1.bf16.msra.mxu0 %v1348
  %1885 = vmatprep.subr.bf16.mxu0 0
  %1886 = vmatpush1.bf16.msra.mxu0 %v1349
  %1887 = vmatprep.subr.bf16.mxu0 0
  %1888 = vmatpush1.bf16.msra.mxu0 0
  %1889 = vmatprep.subr.bf16.mxu0 0
  %1890 = vmatpush1.bf16.msra.mxu0 0
  %1891 = vmatprep.subr.bf16.mxu0 0
  %1892 = vmatpush1.bf16.msra.mxu0 0
  %1893 = vmatprep.subr.bf16.mxu0 0
  %1894 = vmatpush1.bf16.msra.mxu0 0
  %1895 = vmatprep.subr.bf16.mxu0 0
  %1896 = vmatpush1.bf16.msra.mxu0 0
  %1897 = vmatprep.subr.bf16.mxu0 0
  %1898 = vmatpush1.bf16.msra.mxu0 0
  %1899 = vmatprep.subr.bf16.mxu0 0
  %1900 = vmatpush1.bf16.msra.mxu0 0
  %1901 = vmatprep.subr.bf16.mxu0 0
  %1902 = vmatpush1.bf16.msra.mxu0 0
  %1903 = vmatprep.subr.bf16.mxu0 0
  %1904 = vmatpush1.bf16.msra.mxu0 0
  %1905 = vmatprep.subr.bf16.mxu0 0
  %1906 = vmatpush1.bf16.msra.mxu0 0
  %1907 = vmatprep.subr.bf16.mxu0 0
  %1908 = vmatpush1.bf16.msra.mxu0 0
  %1909 = vmatprep.subr.bf16.mxu0 0
  %1910 = vmatpush1.bf16.msra.mxu0 0
  %1911 = vmatprep.mubr.bf16.mxu0 0
  %1912 = vmatmul.mubr.bf16.gmra.mrb[0].mxu0 %v1830
  %v1913 = vpop.f32.mrb[0].mxu0
  %v1914 = vadd.f32 %v1241, %v1913
  %v1915 = vpop.f32.mrb[0].mxu0
  %v1916 = vpop.f32.mrb[0].mxu0
  %v1917 = vpop.f32.mrb[0].mxu0
  %1918 = vdwg.mxu0
  %v1919 = vmul.f32 %v1878, %v1914
  %v1920 = vadd.f32 %v1224, %v1919
  %v1921 = vtanh.pop %v1920
  %v1922 = vsub.f32 1.0, %v1878
  %1924 = vrot.lane.b32.xlu0 %v1921, 64
  %v1925 = vpop.permute.xlu0 %1924
  %v1927 = vmul.f32 %v1922, %v1925
  %v1928 = vmul.f32 %v1878, %v1824
  %v1929 = vadd.f32 %v1927, %v1928
  %v1930 = vpack.c.bf16 %v1929, %v1929
  %1932 = vrot.lane.b32.xlu0 %v1930, 64
  %v1933 = vpop.permute.xlu0 %1932
  %v1935 = vsel %vm214, %v1933, 0
  %1937 = vmatprep.subr.bf16.mxu0 0
  %1938 = vmatpush1.bf16.msra.mxu0 %v1275
  %1939 = vmatprep.subr.bf16.mxu0 0
  %1940 = vmatpush1.bf16.msra.mxu0 %v1276
  %1941 = vmatprep.subr.bf16.mxu0 0
  %1942 = vmatpush1.bf16.msra.mxu0 %v1277
  %1943 = vmatprep.subr.bf16.mxu0 0
  %1944 = vmatpush1.bf16.msra.mxu0 %v1278
  %1945 = vmatprep.subr.bf16.mxu0 0
  %1946 = vmatpush1.bf16.msra.mxu0 0
  %1947 = vmatprep.subr.bf16.mxu0 0
  %1948 = vmatpush1.bf16.msra.mxu0 0
  %1949 = vmatprep.subr.bf16.mxu0 0
  %1950 = vmatpush1.bf16.msra.mxu0 0
  %1951 = vmatprep.subr.bf16.mxu0 0
  %1952 = vmatpush1.bf16.msra.mxu0 0
  %1953 = vmatprep.subr.bf16.mxu0 0
  %1954 = vmatpush1.bf16.msra.mxu0 0
  %1955 = vmatprep.subr.bf16.mxu0 0
  %1956 = vmatpush1.bf16.msra.mxu0 0
  %1957 = vmatprep.subr.bf16.mxu0 0
  %1958 = vmatpush1.bf16.msra.mxu0 0
  %1959 = vmatprep.subr.bf16.mxu0 0
  %1960 = vmatpush1.bf16.msra.mxu0 0
  %1961 = vmatprep.subr.bf16.mxu0 0
  %1962 = vmatpush1.bf16.msra.mxu0 0
  %1963 = vmatprep.subr.bf16.mxu0 0
  %1964 = vmatpush1.bf16.msra.mxu0 0
  %1965 = vmatprep.subr.bf16.mxu0 0
  %1966 = vmatpush1.bf16.msra.mxu0 0
  %1967 = vmatprep.subr.bf16.mxu0 0
  %1968 = vmatpush1.bf16.msra.mxu0 0
  %1969 = vmatprep.mubr.bf16.mxu0 0
  %1970 = vmatmul.mubr.bf16.gmra.mrb[0].mxu0 %v1935
  %v1971 = vpop.f32.mrb[0].mxu0
  %v1972 = vadd.f32 0.0, %v1971
  %v1973 = vpop.f32.mrb[0].mxu0
  %v1974 = vpop.f32.mrb[0].mxu0
  %v1975 = vpop.f32.mrb[0].mxu0
  %1976 = vdwg.mxu0
  %v1977 = vadd.f32 %v1228, %v1972
  %v1978 = vxor.u32 %v1977, 2147483648
  %v1979 = vmul.f32 %v1978, 1.442695
  %v1980 = vpow.pop %v1979
  %v1981 = vadd.f32 %v1980, 1.0
  %v1982 = vrcp.pop %v1981
  %v1983 = vmul.f32 1.0, %v1982
  %1984 = vmatprep.subr.bf16.mxu0 0
  %1985 = vmatpush1.bf16.msra.mxu0 %v1346
  %1986 = vmatprep.subr.bf16.mxu0 0
  %1987 = vmatpush1.bf16.msra.mxu0 %v1347
  %1988 = vmatprep.subr.bf16.mxu0 0
  %1989 = vmatpush1.bf16.msra.mxu0 %v1348
  %1990 = vmatprep.subr.bf16.mxu0 0
  %1991 = vmatpush1.bf16.msra.mxu0 %v1349
  %1992 = vmatprep.subr.bf16.mxu0 0
  %1993 = vmatpush1.bf16.msra.mxu0 0
  %1994 = vmatprep.subr.bf16.mxu0 0
  %1995 = vmatpush1.bf16.msra.mxu0 0
  %1996 = vmatprep.subr.bf16.mxu0 0
  %1997 = vmatpush1.bf16.msra.mxu0 0
  %1998 = vmatprep.subr.bf16.mxu0 0
  %1999 = vmatpush1.bf16.msra.mxu0 0
  %2000 = vmatprep.subr.bf16.mxu0 0
  %2001 = vmatpush1.bf16.msra.mxu0 0
  %2002 = vmatprep.subr.bf16.mxu0 0
  %2003 = vmatpush1.bf16.msra.mxu0 0
  %2004 = vmatprep.subr.bf16.mxu0 0
  %2005 = vmatpush1.bf16.msra.mxu0 0
  %2006 = vmatprep.subr.bf16.mxu0 0
  %2007 = vmatpush1.bf16.msra.mxu0 0
  %2008 = vmatprep.subr.bf16.mxu0 0
  %2009 = vmatpush1.bf16.msra.mxu0 0
  %2010 = vmatprep.subr.bf16.mxu0 0
  %2011 = vmatpush1.bf16.msra.mxu0 0
  %2012 = vmatprep.subr.bf16.mxu0 0
  %2013 = vmatpush1.bf16.msra.mxu0 0
  %2014 = vmatprep.subr.bf16.mxu0 0
  %2015 = vmatpush1.bf16.msra.mxu0 0
  %2016 = vmatprep.mubr.bf16.mxu0 0
  %2017 = vmatmul.mubr.bf16.gmra.mrb[0].mxu0 %v1935
  %v2018 = vpop.f32.mrb[0].mxu0
  %v2019 = vadd.f32 %v1241, %v2018
  %v2020 = vpop.f32.mrb[0].mxu0
  %v2021 = vpop.f32.mrb[0].mxu0
  %v2022 = vpop.f32.mrb[0].mxu0
  %2023 = vdwg.mxu0
  %v2024 = vmul.f32 %v1983, %v2019
  %v2025 = vadd.f32 %v1230, %v2024
  %v2026 = vtanh.pop %v2025
  %v2027 = vsub.f32 1.0, %v1983
  %2029 = vrot.lane.b32.xlu0 %v2026, 64
  %v2030 = vpop.permute.xlu0 %2029
  %v2032 = vmul.f32 %v2027, %v2030
  %v2033 = vmul.f32 %v1983, %v1929
  %v2034 = vadd.f32 %v2032, %v2033
  %v2035 = vpack.c.bf16 %v2034, %v2034
  %2037 = vrot.lane.b32.xlu0 %v2035, 64
  %v2038 = vpop.permute.xlu0 %2037
  %v2040 = vsel %vm214, %v2038, 0
  %2042 = vmatprep.subr.bf16.mxu0 0
  %2043 = vmatpush1.bf16.msra.mxu0 %v1275
  %2044 = vmatprep.subr.bf16.mxu0 0
  %2045 = vmatpush1.bf16.msra.mxu0 %v1276
  %2046 = vmatprep.subr.bf16.mxu0 0
  %2047 = vmatpush1.bf16.msra.mxu0 %v1277
  %2048 = vmatprep.subr.bf16.mxu0 0
  %2049 = vmatpush1.bf16.msra.mxu0 %v1278
  %2050 = vmatprep.subr.bf16.mxu0 0
  %2051 = vmatpush1.bf16.msra.mxu0 0
  %2052 = vmatprep.subr.bf16.mxu0 0
  %2053 = vmatpush1.bf16.msra.mxu0 0
  %2054 = vmatprep.subr.bf16.mxu0 0
  %2055 = vmatpush1.bf16.msra.mxu0 0
  %2056 = vmatprep.subr.bf16.mxu0 0
  %2057 = vmatpush1.bf16.msra.mxu0 0
  %2058 = vmatprep.subr.bf16.mxu0 0
  %2059 = vmatpush1.bf16.msra.mxu0 0
  %2060 = vmatprep.subr.bf16.mxu0 0
  %2061 = vmatpush1.bf16.msra.mxu0 0
  %2062 = vmatprep.subr.bf16.mxu0 0
  %2063 = vmatpush1.bf16.msra.mxu0 0
  %2064 = vmatprep.subr.bf16.mxu0 0
  %2065 = vmatpush1.bf16.msra.mxu0 0
  %2066 = vmatprep.subr.bf16.mxu0 0
  %2067 = vmatpush1.bf16.msra.mxu0 0
  %2068 = vmatprep.subr.bf16.mxu0 0
  %2069 = vmatpush1.bf16.msra.mxu0 0
  %2070 = vmatprep.subr.bf16.mxu0 0
  %2071 = vmatpush1.bf16.msra.mxu0 0
  %2072 = vmatprep.subr.bf16.mxu0 0
  %2073 = vmatpush1.bf16.msra.mxu0 0
  %2074 = vmatprep.mubr.bf16.mxu0 0
  %2075 = vmatmul.mubr.bf16.gmra.mrb[0].mxu0 %v2040
  %v2076 = vpop.f32.mrb[0].mxu0
  %v2077 = vadd.f32 0.0, %v2076
  %v2078 = vpop.f32.mrb[0].mxu0
  %v2079 = vpop.f32.mrb[0].mxu0
  %v2080 = vpop.f32.mrb[0].mxu0
  %2081 = vdwg.mxu0
  %v2082 = vadd.f32 %v1232, %v2077
  %v2083 = vxor.u32 %v2082, 2147483648
  %v2084 = vmul.f32 %v2083, 1.442695
  %v2085 = vpow.pop %v2084
  %v2086 = vadd.f32 %v2085, 1.0
  %v2087 = vrcp.pop %v2086
  %v2088 = vmul.f32 1.0, %v2087
  %2089 = vmatprep.subr.bf16.mxu0 0
  %2090 = vmatpush1.bf16.msra.mxu0 %v1346
  %2091 = vmatprep.subr.bf16.mxu0 0
  %2092 = vmatpush1.bf16.msra.mxu0 %v1347
  %2093 = vmatprep.subr.bf16.mxu0 0
  %2094 = vmatpush1.bf16.msra.mxu0 %v1348
  %2095 = vmatprep.subr.bf16.mxu0 0
  %2096 = vmatpush1.bf16.msra.mxu0 %v1349
  %2097 = vmatprep.subr.bf16.mxu0 0
  %2098 = vmatpush1.bf16.msra.mxu0 0
  %2099 = vmatprep.subr.bf16.mxu0 0
  %2100 = vmatpush1.bf16.msra.mxu0 0
  %2101 = vmatprep.subr.bf16.mxu0 0
  %2102 = vmatpush1.bf16.msra.mxu0 0
  %2103 = vmatprep.subr.bf16.mxu0 0
  %2104 = vmatpush1.bf16.msra.mxu0 0
  %2105 = vmatprep.subr.bf16.mxu0 0
  %2106 = vmatpush1.bf16.msra.mxu0 0
  %2107 = vmatprep.subr.bf16.mxu0 0
  %2108 = vmatpush1.bf16.msra.mxu0 0
  %2109 = vmatprep.subr.bf16.mxu0 0
  %2110 = vmatpush1.bf16.msra.mxu0 0
  %2111 = vmatprep.subr.bf16.mxu0 0
  %2112 = vmatpush1.bf16.msra.mxu0 0
  %2113 = vmatprep.subr.bf16.mxu0 0
  %2114 = vmatpush1.bf16.msra.mxu0 0
  %2115 = vmatprep.subr.bf16.mxu0 0
  %2116 = vmatpush1.bf16.msra.mxu0 0
  %2117 = vmatprep.subr.bf16.mxu0 0
  %2118 = vmatpush1.bf16.msra.mxu0 0
  %2119 = vmatprep.subr.bf16.mxu0 0
  %2120 = vmatpush1.bf16.msra.mxu0 0
  %2121 = vmatprep.mubr.bf16.mxu0 0
  %2122 = vmatmul.mubr.bf16.gmra.mrb[0].mxu0 %v2040
  %v2123 = vpop.f32.mrb[0].mxu0
  %v2124 = vadd.f32 %v1241, %v2123
  %v2125 = vpop.f32.mrb[0].mxu0
  %v2126 = vpop.f32.mrb[0].mxu0
  %v2127 = vpop.f32.mrb[0].mxu0
  %2128 = vdwg.mxu0
  %v2129 = vmul.f32 %v2088, %v2124
  %v2130 = vadd.f32 %v1234, %v2129
  %v2131 = vtanh.pop %v2130
  %v2132 = vsub.f32 1.0, %v2088
  %2134 = vrot.lane.b32.xlu0 %v2131, 64
  %v2135 = vpop.permute.xlu0 %2134
  %v2137 = vmul.f32 %v2132, %v2135
  %v2138 = vmul.f32 %v2088, %v2034
  %v2139 = vadd.f32 %v2137, %v2138
  %v2140 = vld [vmem:[%s11] sm:$0xff]
  %v2141 = vld [vmem:[%s11 + $0x8] sm:$0xff]
  %v2142 = vld [vmem:[%s11 + $0x10] sm:$0xff]
  %v2143 = vld [vmem:[%s11 + $0x18] sm:$0xff]
  %v2144 = vld [vmem:[%s11 + $0x20] sm:$0xff]
  %v2145 = vld [vmem:[%s11 + $0x28] sm:$0xff]
  %v2146 = vld [vmem:[%s11 + $0x30] sm:$0xff]
  %v2147 = vld [vmem:[%s11 + $0x38] sm:$0xff]
  %v2148 = vld [vmem:[%s12] sm:$0x1]
  %v2150 = vlaneseq
  %v2151 = vshrl.u32 %v2150, 7
  %v2152 = vsub.s32 0, %v2151
  %v2153 = vrot.slane %v2148, %v2152
  %2156 = vrot.lane.b32.xlu0 %v2139, 64
  %v2157 = vpop.permute.xlu0 %2156
  %v2158 = vsel %vm214, %v2157, 0
  %2160 = vmatprep.subr.mxu0 0.0
  %2161 = vmatpush1.msra.mxu0 %v2140
  %2162 = vmatprep.subr.mxu0 0.0
  %2163 = vmatpush1.msra.mxu0 %v2141
  %2164 = vmatprep.subr.mxu0 0.0
  %2165 = vmatpush1.msra.mxu0 %v2142
  %2166 = vmatprep.subr.mxu0 0.0
  %2167 = vmatpush1.msra.mxu0 %v2143
  %2168 = vmatprep.subr.mxu0 0.0
  %2169 = vmatpush1.msra.mxu0 %v2144
  %2170 = vmatprep.subr.mxu0 0.0
  %2171 = vmatpush1.msra.mxu0 %v2145
  %2172 = vmatprep.subr.mxu0 0.0
  %2173 = vmatpush1.msra.mxu0 %v2146
  %2174 = vmatprep.subr.mxu0 0.0
  %2175 = vmatpush1.msra.mxu0 %v2147
  %2176 = vmatprep.subr.mxu0 0.0
  %2177 = vmatpush1.msra.mxu0 0.0
  %2178 = vmatprep.subr.mxu0 0.0
  %2179 = vmatpush1.msra.mxu0 0.0
  %2180 = vmatprep.subr.mxu0 0.0
  %2181 = vmatpush1.msra.mxu0 0.0
  %2182 = vmatprep.subr.mxu0 0.0
  %2183 = vmatpush1.msra.mxu0 0.0
  %2184 = vmatprep.subr.mxu0 0.0
  %2185 = vmatpush1.msra.mxu0 0.0
  %2186 = vmatprep.subr.mxu0 0.0
  %2187 = vmatpush1.msra.mxu0 0.0
  %2188 = vmatprep.subr.mxu0 0.0
  %2189 = vmatpush1.msra.mxu0 0.0
  %2190 = vmatprep.subr.mxu0 0.0
  %2191 = vmatpush1.msra.mxu0 0.0
  %2192 = vmatprep.subr.mxu0 0.0
  %2193 = vmatpush1.msra.mxu0 0.0
  %2194 = vmatprep.subr.mxu0 0.0
  %2195 = vmatpush1.msra.mxu0 0.0
  %2196 = vmatprep.subr.mxu0 0.0
  %2197 = vmatpush1.msra.mxu0 0.0
  %2198 = vmatprep.subr.mxu0 0.0
  %2199 = vmatpush1.msra.mxu0 0.0
  %2200 = vmatprep.subr.mxu0 0.0
  %2201 = vmatpush1.msra.mxu0 0.0
  %2202 = vmatprep.subr.mxu0 0.0
  %2203 = vmatpush1.msra.mxu0 0.0
  %2204 = vmatprep.subr.mxu0 0.0
  %2205 = vmatpush1.msra.mxu0 0.0
  %2206 = vmatprep.subr.mxu0 0.0
  %2207 = vmatpush1.msra.mxu0 0.0
  %2208 = vmatprep.subr.mxu0 0.0
  %2209 = vmatpush1.msra.mxu0 0.0
  %2210 = vmatprep.subr.mxu0 0.0
  %2211 = vmatpush1.msra.mxu0 0.0
  %2212 = vmatprep.subr.mxu0 0.0
  %2213 = vmatpush1.msra.mxu0 0.0
  %2214 = vmatprep.subr.mxu0 0.0
  %2215 = vmatpush1.msra.mxu0 0.0
  %2216 = vmatprep.subr.mxu0 0.0
  %2217 = vmatpush1.msra.mxu0 0.0
  %2218 = vmatprep.subr.mxu0 0.0
  %2219 = vmatpush1.msra.mxu0 0.0
  %2220 = vmatprep.subr.mxu0 0.0
  %2221 = vmatpush1.msra.mxu0 0.0
  %2222 = vmatprep.subr.mxu0 0.0
  %2223 = vmatpush1.msra.mxu0 0.0
  %2224 = vmatprep.mubr.f32.mxu0 0.0
  %2225 = vmatmul.mubr.f32.gmra.mrb[0].mxu0 %v2158
  %v2226 = vpop.f32.mrb[0].mxu0
  %v2227 = vadd.f32 %v2153, %v2226
  %v2228 = vpop.f32.mrb[0].mxu0
  %2229 = vdwg.mxu0
  %vm2230 = vcmask 23552
  %2231 = vst.msk [vmem:[%s13] sm:$0xff] %vm2230, %v2227
  // Predicated region
  $region54: #{gru_model_forward.1} parent=0 // pred_check
    _
  $region55: #{gru_model_forward.1} parent=0 // pred_check_branch
    %2233 = sbr.rel (0) target = $region57
  $region56: #{gru_model_forward.1} parent=0 // pred_region
    _
  $region57: #{gru_model_forward.1} parent=0 // pred_fallthru
    _
  // Predicated region
  $region58: #{gru_model_forward.1} parent=0 // pred_check
    _
  $region59: #{gru_model_forward.1} parent=0 // pred_check_branch
    %2235 = sbr.rel (0) target = $region61
  $region60: #{gru_model_forward.1} parent=0 // pred_region
    _
  $region61: #{gru_model_forward.1} parent=0 // pred_fallthru
    _

</llo_original>
